<compile_context>
chip_gen: v7x
topology: tpu7x:2x2x1
jax: 0.10.0
libtpu: 0.0.40
codegen_flags: <defaults>
</compile_context>

<pallas_src>
import jax
import jax.numpy as jnp
import numpy as np
from jax.experimental import pallas as pl
from jax.experimental.pallas import tpu as pltpu

BN_EPS = 1e-5
BN_SCALE = 1.0 / (1.0 + BN_EPS) ** 0.5  # eval-mode BN: mean=0, var=1, identity affine


def _round_up(n, m):
    return ((n + m - 1) // m) * m


def _pick_tile(n, cap):
    """Largest multiple of 128 that divides n and is <= cap; falls back to n."""
    if n % 128 != 0:
        return n  # TODO(synk): pad + mask instead of a lane-sparse full block.
    best = 128
    t = 256
    while t <= min(n, cap):
        if n % t == 0:
            best = t
        t += 128
    return best


def _vmem_capacity_bytes():
    try:
        return int(pltpu.get_tpu_info().vmem_capacity_bytes)
    except Exception:
        return 64 << 20  # conservative default: v7x per-TensorCore VMEM


def _vmem_limit_bytes(need_bytes):
    # ~20% headroom for compiler-internal scratch / semaphores:
    # ceiling ~51 MiB on v7x (64 MiB phys), ~102 MiB on v5e/v6e (128 MiB phys).
    cap = int(_vmem_capacity_bytes() * 0.8)
    return int(min(max(need_bytes, 32 << 20), cap))


# ----------------------------------------------------------------------------
# Kernel 1: all three 1x1-conv 'cna' branches as ONE stacked matmul.
# Grid: (B, N_tiles), both axes parallel.  1x1 conv over NCHW == (Cout, Cin) @
# (Cin, TN) matmul on the MXU.  BN scale (and 1/num_features for the mid/phi
# branch) are pre-folded into the weights/biases by the wrapper.
# ----------------------------------------------------------------------------
def _branches_kernel(x_ref, w_ref, b_ref, mid_ref, bot_ref, top_ref):
    xb = x_ref[0].astype(jnp.bfloat16)                                  # (C, TN)
    y = jnp.dot(w_ref[...], xb, preferred_element_type=jnp.float32)    # (Cs, TN)
    y = jnp.maximum(y + b_ref[...], 0.0)                               # bias + ReLU
    cr = mid_ref.shape[1]
    c = bot_ref.shape[1]
    mid_ref[0] = y[:cr].astype(mid_ref.dtype)            # phi rows (pre-scaled by 1/N)
    bot_ref[0] = y[cr:cr + c].astype(bot_ref.dtype)      # theta rows
    top_ref[0] = y[cr + c:].astype(top_ref.dtype)        # outv rows


# ----------------------------------------------------------------------------
# Kernel 2: N-tiled attention + gamma-scaled residual.
# Grid: (B, 2, nt).  Phase p=0 accumulates attn = phi @ theta into a (Cr, C)
# f32 VMEM scratch (1/N pre-folded into phi); phase p=1 applies
# out_j = outv_j @ (gamma*attn) on the bf16 MXU and adds the residual tile.
# The output block index only advances once the tile has been written in
# phase 1, so no stale blocks are ever flushed.
# ----------------------------------------------------------------------------
def _attention_kernel(gamma_ref, phi_ref, theta_ref, outv_ref, x_ref, y_ref, acc_ref):
    p = pl.program_id(1)   # phase: 0 = accumulate attention, 1 = apply + residual
    j = pl.program_id(2)   # N-tile index

    @pl.when(jnp.logical_and(p == 0, j == 0))
    def _():
        acc_ref[...] = jnp.zeros_like(acc_ref)

    @pl.when(p == 0)
    def _():
        # attn partial: (Cr, TN) @ (TN, C) -> (Cr, C), bf16 operands, f32 acc.
        acc_ref[...] += jnp.dot(phi_ref[0], theta_ref[0],
                                preferred_element_type=jnp.float32)

    @pl.when(p == 1)
    def _():
        # gamma folded into the tiny (Cr, C) matrix; keep the second (larger)
        # matmul on the bf16 MXU path with f32 accumulation.
        attn = (gamma_ref[0] * acc_ref[...]).astype(jnp.bfloat16)          # (Cr, C)
        out = jnp.dot(outv_ref[0], attn, preferred_element_type=jnp.float32)  # (TN, C)
        y_ref[0] = out + x_ref[0]                                          # f32 residual


@jax.jit
def self_attention_forward(x, params):
    B, C, H, W = x.shape
    N = H * W
    Cr = params["mid_w"].shape[0]
    Cs = 2 * Cr + C

    # Host-side prep: fold BN scale (and 1/N into the phi branch) into the
    # stacked conv weights/biases; cast weights to bf16 for the MXU.
    w_stack = jnp.concatenate(
        [params["mid_w"] * (BN_SCALE / N),
         params["bot_w"] * BN_SCALE,
         params["top_w"] * BN_SCALE], axis=0).astype(jnp.bfloat16)        # (Cs, C)
    b_stack = jnp.concatenate(
        [params["mid_b"] * (BN_SCALE / N),
         params["bot_b"] * BN_SCALE,
         params["top_b"] * BN_SCALE], axis=0).astype(jnp.float32)         # (Cs, 1)
    gamma = params["gamma"].reshape(1).astype(jnp.float32)

    x_cn = x.reshape(B, C, N)

    # ---------------- Kernel 1: stacked branch matmul -----------------------
    bn = _pick_tile(N, 512)
    nt1 = N // bn

    k1_need = 2 * (_round_up(C, 8) * bn * 4                     # x tile (f32)
                   + 2 * _round_up(Cr, 16) * bn * 2             # mid/top tiles (bf16)
                   + _round_up(C, 16) * bn * 2)                 # bot tile (bf16)
    k1_need += _round_up(Cs, 16) * _round_up(C, 128) * 2        # resident weights
    k1_need += _round_up(Cs, 8) * 128 * 4                       # resident bias (lane-padded)
    k1_need += 8 << 20

    mid, bot, top = pl.pallas_call(
        _branches_kernel,
        out_shape=(
            jax.ShapeDtypeStruct((B, Cr, N), jnp.bfloat16),
            jax.ShapeDtypeStruct((B, C, N), jnp.bfloat16),
            jax.ShapeDtypeStruct((B, Cr, N), jnp.bfloat16),
        ),
        grid=(B, nt1),
        in_specs=[
            pl.BlockSpec((1, C, bn), lambda b, j: (b, 0, j)),
            pl.BlockSpec((Cs, C), lambda b, j: (0, 0)),
            pl.BlockSpec((Cs, 1), lambda b, j: (0, 0)),
        ],
        out_specs=(
            pl.BlockSpec((1, Cr, bn), lambda b, j: (b, 0, j)),
            pl.BlockSpec((1, C, bn), lambda b, j: (b, 0, j)),
            pl.BlockSpec((1, Cr, bn), lambda b, j: (b, 0, j)),
        ),
        compiler_params=pltpu.CompilerParams(
            dimension_semantics=("parallel", "parallel"),
            vmem_limit_bytes=_vmem_limit_bytes(k1_need)),
    )(x_cn, w_stack, b_stack)

    # Raw row-major reshapes (free bitcasts on HBM arrays) — exactly reproduce
    # the PyTorch `.view` memory reinterpretation (NOT a transpose):
    theta = bot.reshape(B, N, C)    # bot_branch(x).view(B, num_features, -1)
    outv = top.reshape(B, N, Cr)    # top_branch(x).view(B, num_features, -1)
    x_nc = x.reshape(B, N, C)       # residual re-viewed into the (N, C) layout
    # phi = mid is already the natural (B, Cr, N) view.

    # ---------------- Kernel 2: N-tiled attention + residual ----------------
    tn = _pick_tile(N, 512)
    nt2 = N // tn

    k2_need = 2 * (_round_up(Cr, 16) * tn * 2                          # phi tile
                   + _round_up(tn, 16) * _round_up(C, 128) * 2         # theta tile
                   + _round_up(tn, 16) * 128 * 2                       # outv tile (Cr lane-padded)
                   + 2 * _round_up(tn, 8) * _round_up(C, 128) * 4)     # x + y tiles (f32)
    k2_need += _round_up(Cr, 8) * _round_up(C, 128) * 4                # attn accumulator
    k2_need += 8 << 20

    y_nc = pl.pallas_call(
        _attention_kernel,
        out_shape=jax.ShapeDtypeStruct((B, N, C), jnp.float32),
        grid=(B, 2, nt2),
        in_specs=[
            pl.BlockSpec(memory_space=pltpu.MemorySpace.SMEM),                     # gamma
            pl.BlockSpec((1, Cr, tn), lambda b, p, j: (b, 0, j * (1 - p))),        # phi
            pl.BlockSpec((1, tn, C), lambda b, p, j: (b, j * (1 - p), 0)),         # theta
            pl.BlockSpec((1, tn, Cr), lambda b, p, j: (b, j * p, 0)),              # outv
            pl.BlockSpec((1, tn, C), lambda b, p, j: (b, j * p, 0)),               # x residual
        ],
        out_specs=pl.BlockSpec((1, tn, C), lambda b, p, j: (b, j * p, 0)),
        scratch_shapes=[pltpu.VMEM((Cr, C), jnp.float32)],
        compiler_params=pltpu.CompilerParams(
            dimension_semantics=("parallel", "arbitrary", "arbitrary"),
            vmem_limit_bytes=_vmem_limit_bytes(k2_need)),
    )(gamma, mid, theta, outv, x_nc)

    # final `.view(B, -1, H, W)` — again a raw row-major reshape (free).
    return y_nc.reshape(B, C, H, W)


# ----------------------------------------------------------------------------
# Pure-JAX f32 reference (mirrors the PyTorch forward exactly) for verification.
# ----------------------------------------------------------------------------
def reference_forward(x, params):
    B, C, H, W = x.shape
    N = H * W

    def conv_block(x, w, b):
        y = jnp.einsum('oc,bcn->bon', w, x.reshape(B, C, N)) + b.reshape(1, -1, 1)
        y = y * BN_SCALE
        return jnp.maximum(y, 0.0).reshape(B, -1, H, W)

    mid = conv_block(x, params["mid_w"], params["mid_b"])
    bot = conv_block(x, params["bot_w"], params["bot_b"])
    top = conv_block(x, params["top_w"], params["top_b"])

    phi = mid.reshape(B, -1, N)
    theta = bot.reshape(B, N, -1)
    attention = jnp.einsum('bij,bjk->bik', phi, theta) / N
    out = top.reshape(B, N, -1)
    out = jnp.einsum('bij,bjk->bik', out, attention).reshape(B, -1, H, W)
    return params["gamma"] * out + x


if __name__ == "__main__":
    # Shapes chosen so the large blocks are lane-dense: N = 16*16 = 256 and
    # C = 128 are multiples of 128 (Cr = 16 is sublane-aligned for bf16/f32).
    B, C, H, W = 2, 128, 16, 16
    reduction_ratio = 8
    Cr = C // reduction_ratio

    key = jax.random.PRNGKey(0)
    keys = jax.random.split(key, 7)
    x = jax.random.normal(keys[0], (B, C, H, W), jnp.float32)

    params = {
        "mid_w": jax.random.normal(keys[1], (Cr, C), jnp.float32) * 0.1,
        "mid_b": jax.random.normal(keys[2], (Cr, 1), jnp.float32) * 0.1,
        "bot_w": jax.random.normal(keys[3], (C, C), jnp.float32) * 0.1,
        "bot_b": jax.random.normal(keys[4], (C, 1), jnp.float32) * 0.1,
        "top_w": jax.random.normal(keys[5], (Cr, C), jnp.float32) * 0.1,
        "top_b": jax.random.normal(keys[6], (Cr, 1), jnp.float32) * 0.1,
        # PyTorch init is torch.zeros(1); use a deterministic nonzero value so the
        # attention path actually contributes to the output under test.
        "gamma": jnp.full((1,), 0.5, jnp.float32),
    }

    y = jax.block_until_ready(self_attention_forward(x, params))
    y_ref = reference_forward(x, params)

    assert y.shape == x.shape and y.dtype == x.dtype
    # Tolerance accounts for bf16 matmul operands / bf16 intermediates / bf16
    # attention matrix (all with f32 accumulation).
    np.testing.assert_allclose(np.asarray(y), np.asarray(y_ref), rtol=2e-2, atol=3e-2)
    print("KERNEL_OK")
</pallas_src>

<mosaic_0001>
module attributes {stable_mosaic.version = 11 : i64} {
  func.func @_branches_kernel(%arg0: i32, %arg1: i32, %arg2: memref<1x128x256xf32, #tpu.memory_space<vmem>>, %arg3: memref<160x128xbf16, #tpu.memory_space<vmem>>, %arg4: memref<160x1xf32, #tpu.memory_space<vmem>>, %arg5: memref<1x16x256xbf16, #tpu.memory_space<vmem>>, %arg6: memref<1x128x256xbf16, #tpu.memory_space<vmem>>, %arg7: memref<1x16x256xbf16, #tpu.memory_space<vmem>>) attributes {dimension_semantics = [#tpu.dimension_semantics<parallel>, #tpu.dimension_semantics<parallel>], iteration_bounds = array<i64: 2, 1>, scalar_prefetch = 0 : i64, scratch_operands = 0 : i64, tpu.core_type = #tpu.core_type<tc>, window_params = [{transform_indices = @transform_0, window_bounds = array<i64: 1, 128, 256>}, {pipeline_mode = #tpu.pipeline_mode<synchronous>, transform_indices = @transform_1, window_bounds = array<i64: 160, 128>}, {pipeline_mode = #tpu.pipeline_mode<synchronous>, transform_indices = @transform_2, window_bounds = array<i64: 160, 1>}, {transform_indices = @transform_3, window_bounds = array<i64: 1, 16, 256>}, {transform_indices = @transform_4, window_bounds = array<i64: 1, 128, 256>}, {transform_indices = @transform_5, window_bounds = array<i64: 1, 16, 256>}]} {
    %c0 = arith.constant 0 : index
    %c0_0 = arith.constant 0 : index
    %c0_1 = arith.constant 0 : index
    %0 = vector.load %arg2[%c0, %c0_0, %c0_1] : memref<1x128x256xf32, #tpu.memory_space<vmem>>, vector<1x128x256xf32>
    %1 = vector.shape_cast %0 : vector<1x128x256xf32> to vector<128x256xf32>
    %2 = arith.truncf %1 : vector<128x256xf32> to vector<128x256xbf16>
    %c0_2 = arith.constant 0 : index
    %c0_3 = arith.constant 0 : index
    %3 = vector.load %arg3[%c0_2, %c0_3] : memref<160x128xbf16, #tpu.memory_space<vmem>>, vector<160x128xbf16>
    %cst = arith.constant dense<0.000000e+00> : vector<160x256xf32>
    %4 = tpu.matmul %3, %2, %cst {dimension_numbers = #tpu.dot_dimension_numbers<[1], [0], [0], [1], [0, 0, 1, 1], [], []>} : vector<160x128xbf16>, vector<128x256xbf16>, vector<160x256xf32> -> vector<160x256xf32>
    %c0_4 = arith.constant 0 : index
    %c0_5 = arith.constant 0 : index
    %5 = vector.load %arg4[%c0_4, %c0_5] : memref<160x1xf32, #tpu.memory_space<vmem>>, vector<160x1xf32>
    %6 = vector.broadcast %5 : vector<160x1xf32> to vector<160x256xf32>
    %7 = arith.addf %4, %6 : vector<160x256xf32>
    %cst_6 = arith.constant 0.000000e+00 : f32
    %8 = vector.broadcast %cst_6 : f32 to vector<160x256xf32>
    %9 = arith.maximumf %7, %8 : vector<160x256xf32>
    %10 = vector.extract_strided_slice %9 {offsets = [0, 0], sizes = [16, 256], strides = [1, 1]} : vector<160x256xf32> to vector<16x256xf32>
    %11 = arith.truncf %10 : vector<16x256xf32> to vector<16x256xbf16>
    %c0_7 = arith.constant 0 : index
    %c0_8 = arith.constant 0 : index
    %c0_9 = arith.constant 0 : index
    %12 = vector.load %arg5[%c0_7, %c0_8, %c0_9] : memref<1x16x256xbf16, #tpu.memory_space<vmem>>, vector<1x16x256xbf16>
    %13 = vector.shape_cast %12 : vector<1x16x256xbf16> to vector<16x256xbf16>
    %14 = vector.shape_cast %11 : vector<16x256xbf16> to vector<1x16x256xbf16>
    tpu.vector_store %arg5[%c0_7, %c0_8, %c0_9], %14 {strides = array<i32>} : memref<1x16x256xbf16, #tpu.memory_space<vmem>>, vector<1x16x256xbf16>,
    %15 = vector.extract_strided_slice %9 {offsets = [16, 0], sizes = [128, 256], strides = [1, 1]} : vector<160x256xf32> to vector<128x256xf32>
    %16 = arith.truncf %15 : vector<128x256xf32> to vector<128x256xbf16>
    %c0_10 = arith.constant 0 : index
    %c0_11 = arith.constant 0 : index
    %c0_12 = arith.constant 0 : index
    %17 = vector.load %arg6[%c0_10, %c0_11, %c0_12] : memref<1x128x256xbf16, #tpu.memory_space<vmem>>, vector<1x128x256xbf16>
    %18 = vector.shape_cast %17 : vector<1x128x256xbf16> to vector<128x256xbf16>
    %19 = vector.shape_cast %16 : vector<128x256xbf16> to vector<1x128x256xbf16>
    tpu.vector_store %arg6[%c0_10, %c0_11, %c0_12], %19 {strides = array<i32>} : memref<1x128x256xbf16, #tpu.memory_space<vmem>>, vector<1x128x256xbf16>,
    %20 = vector.extract_strided_slice %9 {offsets = [144, 0], sizes = [16, 256], strides = [1, 1]} : vector<160x256xf32> to vector<16x256xf32>
    %21 = arith.truncf %20 : vector<16x256xf32> to vector<16x256xbf16>
    %c0_13 = arith.constant 0 : index
    %c0_14 = arith.constant 0 : index
    %c0_15 = arith.constant 0 : index
    %22 = vector.load %arg7[%c0_13, %c0_14, %c0_15] : memref<1x16x256xbf16, #tpu.memory_space<vmem>>, vector<1x16x256xbf16>
    %23 = vector.shape_cast %22 : vector<1x16x256xbf16> to vector<16x256xbf16>
    %24 = vector.shape_cast %21 : vector<16x256xbf16> to vector<1x16x256xbf16>
    tpu.vector_store %arg7[%c0_13, %c0_14, %c0_15], %24 {strides = array<i32>} : memref<1x16x256xbf16, #tpu.memory_space<vmem>>, vector<1x16x256xbf16>,
    return
  }
  func.func @transform_0(%arg0: i32, %arg1: i32) -> (i32, i32, i32) {
    %c0_i32 = arith.constant 0 : i32
    %c0_i32_0 = arith.constant 0 : i32
    return %arg0, %c0_i32, %arg1 : i32, i32, i32
  }
  func.func @transform_1(%arg0: i32, %arg1: i32) -> (i32, i32) {
    %c0_i32 = arith.constant 0 : i32
    %c0_i32_0 = arith.constant 0 : i32
    %c0_i32_1 = arith.constant 0 : i32
    return %c0_i32, %c0_i32_0 : i32, i32
  }
  func.func @transform_2(%arg0: i32, %arg1: i32) -> (i32, i32) {
    %c0_i32 = arith.constant 0 : i32
    %c0_i32_0 = arith.constant 0 : i32
    %c0_i32_1 = arith.constant 0 : i32
    return %c0_i32, %c0_i32_0 : i32, i32
  }
  func.func @transform_3(%arg0: i32, %arg1: i32) -> (i32, i32, i32) {
    %c0_i32 = arith.constant 0 : i32
    %c0_i32_0 = arith.constant 0 : i32
    return %arg0, %c0_i32, %arg1 : i32, i32, i32
  }
  func.func @transform_4(%arg0: i32, %arg1: i32) -> (i32, i32, i32) {
    %c0_i32 = arith.constant 0 : i32
    %c0_i32_0 = arith.constant 0 : i32
    return %arg0, %c0_i32, %arg1 : i32, i32, i32
  }
  func.func @transform_5(%arg0: i32, %arg1: i32) -> (i32, i32, i32) {
    %c0_i32 = arith.constant 0 : i32
    %c0_i32_0 = arith.constant 0 : i32
    return %arg0, %c0_i32, %arg1 : i32, i32, i32
  }
}

module attributes {stable_mosaic.version = 11 : i64} {
  func.func @_attention_kernel(%arg0: i32, %arg1: i32, %arg2: i32, %arg3: memref<1xf32, #tpu.memory_space<smem>>, %arg4: memref<1x16x256xbf16, #tpu.memory_space<vmem>>, %arg5: memref<1x256x128xbf16, #tpu.memory_space<vmem>>, %arg6: memref<1x256x16xbf16, #tpu.memory_space<vmem>>, %arg7: memref<1x256x128xf32, #tpu.memory_space<vmem>>, %arg8: memref<1x256x128xf32, #tpu.memory_space<vmem>>, %arg9: memref<16x128xf32, #tpu.memory_space<vmem>>) attributes {dimension_semantics = [#tpu.dimension_semantics<parallel>, #tpu.dimension_semantics<arbitrary>, #tpu.dimension_semantics<arbitrary>], iteration_bounds = array<i64: 2, 2, 1>, scalar_prefetch = 0 : i64, scratch_operands = 1 : i64, tpu.core_type = #tpu.core_type<tc>, window_params = [{transform_indices = @transform_0, window_bounds = array<i64: 1>}, {transform_indices = @transform_1, window_bounds = array<i64: 1, 16, 256>}, {transform_indices = @transform_2, window_bounds = array<i64: 1, 256, 128>}, {transform_indices = @transform_3, window_bounds = array<i64: 1, 256, 16>}, {transform_indices = @transform_4, window_bounds = array<i64: 1, 256, 128>}, {transform_indices = @transform_5, window_bounds = array<i64: 1, 256, 128>}]} {
    %c0_i32 = arith.constant 0 : i32
    %0 = arith.cmpi eq, %arg1, %c0_i32 : i32
    %c0_i32_0 = arith.constant 0 : i32
    %1 = arith.cmpi eq, %arg2, %c0_i32_0 : i32
    %2 = arith.andi %0, %1 : i1
    %3 = arith.extui %2 : i1 to i32
    %c0_i32_1 = arith.constant 0 : i32
    %4 = arith.cmpi ne, %3, %c0_i32_1 : i32
    scf.if %4 {
      %cst = arith.constant 0.000000e+00 : f32
      %11 = vector.broadcast %cst : f32 to vector<16x128xf32>
      %c0 = arith.constant 0 : index
      %c0_5 = arith.constant 0 : index
      %12 = vector.load %arg9[%c0, %c0_5] : memref<16x128xf32, #tpu.memory_space<vmem>>, vector<16x128xf32>
      tpu.vector_store %arg9[%c0, %c0_5], %11 {strides = array<i32>} : memref<16x128xf32, #tpu.memory_space<vmem>>, vector<16x128xf32>,
    } else {
    }
    %c0_i32_2 = arith.constant 0 : i32
    %5 = arith.cmpi eq, %arg1, %c0_i32_2 : i32
    %6 = arith.extui %5 : i1 to i32
    %c0_i32_3 = arith.constant 0 : i32
    %7 = arith.cmpi ne, %6, %c0_i32_3 : i32
    scf.if %7 {
      %c0 = arith.constant 0 : index
      %c0_5 = arith.constant 0 : index
      %11 = vector.load %arg9[%c0, %c0_5] : memref<16x128xf32, #tpu.memory_space<vmem>>, vector<16x128xf32>
      %c0_6 = arith.constant 0 : index
      %c0_7 = arith.constant 0 : index
      %c0_8 = arith.constant 0 : index
      %12 = vector.load %arg4[%c0_6, %c0_7, %c0_8] : memref<1x16x256xbf16, #tpu.memory_space<vmem>>, vector<1x16x256xbf16>
      %13 = vector.shape_cast %12 : vector<1x16x256xbf16> to vector<16x256xbf16>
      %c0_9 = arith.constant 0 : index
      %c0_10 = arith.constant 0 : index
      %c0_11 = arith.constant 0 : index
      %14 = vector.load %arg5[%c0_9, %c0_10, %c0_11] : memref<1x256x128xbf16, #tpu.memory_space<vmem>>, vector<1x256x128xbf16>
      %15 = vector.shape_cast %14 : vector<1x256x128xbf16> to vector<256x128xbf16>
      %cst = arith.constant dense<0.000000e+00> : vector<16x128xf32>
      %16 = tpu.matmul %13, %15, %cst {dimension_numbers = #tpu.dot_dimension_numbers<[1], [0], [0], [1], [0, 0, 1, 1], [], []>} : vector<16x256xbf16>, vector<256x128xbf16>, vector<16x128xf32> -> vector<16x128xf32>
      %17 = arith.addf %11, %16 : vector<16x128xf32>
      %c0_12 = arith.constant 0 : index
      %c0_13 = arith.constant 0 : index
      %18 = vector.load %arg9[%c0_12, %c0_13] : memref<16x128xf32, #tpu.memory_space<vmem>>, vector<16x128xf32>
      tpu.vector_store %arg9[%c0_12, %c0_13], %17 {strides = array<i32>} : memref<16x128xf32, #tpu.memory_space<vmem>>, vector<16x128xf32>,
    } else {
    }
    %c1_i32 = arith.constant 1 : i32
    %8 = arith.cmpi eq, %arg1, %c1_i32 : i32
    %9 = arith.extui %8 : i1 to i32
    %c0_i32_4 = arith.constant 0 : i32
    %10 = arith.cmpi ne, %9, %c0_i32_4 : i32
    scf.if %10 {
      %c0 = arith.constant 0 : index
      %11 = memref.load %arg3[%c0] : memref<1xf32, #tpu.memory_space<smem>>
      %c0_5 = arith.constant 0 : index
      %c0_6 = arith.constant 0 : index
      %12 = vector.load %arg9[%c0_5, %c0_6] : memref<16x128xf32, #tpu.memory_space<vmem>>, vector<16x128xf32>
      %13 = vector.broadcast %11 : f32 to vector<16x128xf32>
      %14 = arith.mulf %13, %12 : vector<16x128xf32>
      %15 = arith.truncf %14 : vector<16x128xf32> to vector<16x128xbf16>
      %c0_7 = arith.constant 0 : index
      %c0_8 = arith.constant 0 : index
      %c0_9 = arith.constant 0 : index
      %16 = vector.load %arg6[%c0_7, %c0_8, %c0_9] : memref<1x256x16xbf16, #tpu.memory_space<vmem>>, vector<1x256x16xbf16>
      %17 = vector.shape_cast %16 : vector<1x256x16xbf16> to vector<256x16xbf16>
      %cst = arith.constant dense<0.000000e+00> : vector<256x128xf32>
      %18 = tpu.matmul %17, %15, %cst {dimension_numbers = #tpu.dot_dimension_numbers<[1], [0], [0], [1], [0, 0, 1, 1], [], []>} : vector<256x16xbf16>, vector<16x128xbf16>, vector<256x128xf32> -> vector<256x128xf32>
      %c0_10 = arith.constant 0 : index
      %c0_11 = arith.constant 0 : index
      %c0_12 = arith.constant 0 : index
      %19 = vector.load %arg7[%c0_10, %c0_11, %c0_12] : memref<1x256x128xf32, #tpu.memory_space<vmem>>, vector<1x256x128xf32>
      %20 = vector.shape_cast %19 : vector<1x256x128xf32> to vector<256x128xf32>
      %21 = arith.addf %18, %20 : vector<256x128xf32>
      %c0_13 = arith.constant 0 : index
      %c0_14 = arith.constant 0 : index
      %c0_15 = arith.constant 0 : index
      %22 = vector.load %arg8[%c0_13, %c0_14, %c0_15] : memref<1x256x128xf32, #tpu.memory_space<vmem>>, vector<1x256x128xf32>
      %23 = vector.shape_cast %22 : vector<1x256x128xf32> to vector<256x128xf32>
      %24 = vector.shape_cast %21 : vector<256x128xf32> to vector<1x256x128xf32>
      tpu.vector_store %arg8[%c0_13, %c0_14, %c0_15], %24 {strides = array<i32>} : memref<1x256x128xf32, #tpu.memory_space<vmem>>, vector<1x256x128xf32>,
    } else {
    }
    return
  }
  func.func @transform_0(%arg0: i32, %arg1: i32, %arg2: i32) -> i32 {
    %c0_i32 = arith.constant 0 : i32
    %c0_i32_0 = arith.constant 0 : i32
    return %c0_i32 : i32
  }
  func.func @transform_1(%arg0: i32, %arg1: i32, %arg2: i32) -> (i32, i32, i32) {
    %c1_i32 = arith.constant 1 : i32
    %0 = arith.subi %c1_i32, %arg1 : i32
    %1 = arith.muli %arg2, %0 : i32
    %c0_i32 = arith.constant 0 : i32
    %c0_i32_0 = arith.constant 0 : i32
    return %arg0, %c0_i32, %1 : i32, i32, i32
  }
  func.func @transform_2(%arg0: i32, %arg1: i32, %arg2: i32) -> (i32, i32, i32) {
    %c1_i32 = arith.constant 1 : i32
    %0 = arith.subi %c1_i32, %arg1 : i32
    %1 = arith.muli %arg2, %0 : i32
    %c0_i32 = arith.constant 0 : i32
    %c0_i32_0 = arith.constant 0 : i32
    return %arg0, %1, %c0_i32 : i32, i32, i32
  }
  func.func @transform_3(%arg0: i32, %arg1: i32, %arg2: i32) -> (i32, i32, i32) {
    %0 = arith.muli %arg2, %arg1 : i32
    %c0_i32 = arith.constant 0 : i32
    %c0_i32_0 = arith.constant 0 : i32
    return %arg0, %0, %c0_i32 : i32, i32, i32
  }
  func.func @transform_4(%arg0: i32, %arg1: i32, %arg2: i32) -> (i32, i32, i32) {
    %0 = arith.muli %arg2, %arg1 : i32
    %c0_i32 = arith.constant 0 : i32
    %c0_i32_0 = arith.constant 0 : i32
    return %arg0, %0, %c0_i32 : i32, i32, i32
  }
  func.func @transform_5(%arg0: i32, %arg1: i32, %arg2: i32) -> (i32, i32, i32) {
    %0 = arith.muli %arg2, %arg1 : i32
    %c0_i32 = arith.constant 0 : i32
    %c0_i32_0 = arith.constant 0 : i32
    return %arg0, %0, %c0_i32 : i32, i32, i32
  }
}

</mosaic_0001>

<llo_original>
// kernel: self_attention_forward.2
$region0: #{self_attention_forward.2}
  #allocation0 [shape = 'u32[]', space=smem, size = 0x4, offset = 0x4, fixed_abs, tag = 'smem constant byte address 0x4 - core index']
  #allocation1 [shape = 'u32[144,128]{1,0:T(1,128)}', space=vmem, size = 0x12000, scoped, tag = 'internal scratch']
  %s0 = inlined_call_operand.vmem [shape: f32[2,128,256], index: 0, kind: input, shape index: {}]
  %s1 = inlined_call_operand.vmem [shape: bf16[160,128], index: 1, kind: input, shape index: {}]
  %s2 = inlined_call_operand.vmem [shape: f32[160,1], index: 2, kind: input, shape index: {}]
  %s3 = inlined_call_operand.vmem [shape: bf16[2,16,256], index: 3, kind: output, shape index: {0}]
  %s4 = inlined_call_operand.vmem [shape: bf16[2,128,256], index: 4, kind: output, shape index: {1}]
  %s5 = inlined_call_operand.vmem [shape: bf16[2,16,256], index: 5, kind: output, shape index: {2}]
  %6 = xla_tuple %s3, %s4, %s5
  %s7 = sld [smem:[#allocation0]]
  $region61: #{self_attention_forward.2} parent=0
    _
  %s9 = ssub.s32 1, %s7
  %s10 = scalar_select 0, %s9, %s7
  loop: start=0, step=1, limit=4
  $region2: #{self_attention_forward.2} parent=0 // loop_pre_header
    _
  $region3: #{self_attention_forward.2} parent=0 // loop_header
    %s12 = sphi 0, %s16
    %p13 = scmp.ge.s32.totalorder %s12, 4
    %s19 = sphi 0, %s31
    %s20 = sphi 0, %s27
    %s21 = sphi 0, %s19
    %s22 = sphi 0, %s20
    %s23 = sphi 0, %s21
    %s24 = sphi 0, %s22
    %s36 = sphi 0, %s38
    %s39 = sphi 0, %s36
    %s40 = sphi 0, %s39
    %s56 = sphi 0, %s40
    %s60 = sphi 0, %s60
    %s62 = sphi 0, %s60
    %s63 = sphi 0, %s62
    %s77 = sphi 0, %s63
    %s81 = sphi 0, %s81
    %s83 = sphi 0, %s81
    %s84 = sphi 0, %s83
    %s98 = sphi 0, %s84
    %s106 = sphi 0, %s108
    %s109 = sphi 0, %s106
    %s110 = sphi 0, %s109
    %s126 = sphi 0, %s110
    %s134 = sphi 0, %s136
    %s137 = sphi 0, %s134
    %s138 = sphi 0, %s137
    %s154 = sphi 0, %s138
    %s162 = sphi 0, %s164
    %s165 = sphi 0, %s162
    %s166 = sphi 0, %s165
    %s182 = sphi 0, %s166
  $region4: #{self_attention_forward.2} parent=0 // loop_header_branch
    %15 = sbr.rel (%p13) target = $region8
  $region5: #{self_attention_forward.2} parent=0 // loop_body
    %s17 = ssub.s32 %s12, 1
    %s18 = ssub.s32 %s12, 2
    %s25 = sadd.s32 1, %s20
    %p26 = scmp.ge.s32.totalorder %s25, 1
    %s27 = scalar_select %p26, 0, %s25
    %s28 = sadd.s32 1, %s19
    %s29 = scalar_select %p26, %s28, %s19
    %p30 = scmp.ge.s32.totalorder %s29, 2
    %s31 = scalar_select %p30, 0, %s29
    %s32 = ssub.s32 %s19, %s31
    %s33 = ssub.s32 %s20, %s27
    %s34 = sor.u32 %s32, %s33
    %p35 = scmp.eq.s32.totalorder %s34, 0
    %s37 = sadd.s32 %s36, 1
    %s38 = scalar_select %p35, %s36, %s37
    %p41 = pneg %p35
    %p42 = scmp.eq.s32.totalorder %s12, 1
    %p43 = por %p41, %p42
    %p44 = scmp.ne.s32.totalorder %s36, %s39
    %p45 = scmp.eq.s32.totalorder %s12, 0
    %p46 = por %p44, %p45
    %p47 = scmp.ne.s32.totalorder %s36, %s39
    %p48 = scmp.eq.s32.totalorder %s17, 1
    %p49 = por %p47, %p48
    %p50 = scmp.ne.s32.totalorder %s39, %s40
    %p51 = scmp.eq.s32.totalorder %s17, 0
    %p52 = por %p50, %p51
    %p53 = scmp.ne.s32.totalorder %s39, %s40
    %p54 = scmp.eq.s32.totalorder %s18, 1
    %p55 = por %p53, %p54
    %p57 = scmp.ne.s32.totalorder %s40, %s56
    %p58 = scmp.eq.s32.totalorder %s18, 0
    %p59 = por %p57, %p58
    %s61 = sadd.s32 %s60, 1
    %p64 = scmp.eq.s32.totalorder %s12, 1
    %p65 = scmp.ne.s32.totalorder %s60, %s62
    %p66 = scmp.eq.s32.totalorder %s12, 0
    %p67 = por %p65, %p66
    %p68 = scmp.ne.s32.totalorder %s60, %s62
    %p69 = scmp.eq.s32.totalorder %s17, 1
    %p70 = por %p68, %p69
    %p71 = scmp.ne.s32.totalorder %s62, %s63
    %p72 = scmp.eq.s32.totalorder %s17, 0
    %p73 = por %p71, %p72
    %p74 = scmp.ne.s32.totalorder %s62, %s63
    %p75 = scmp.eq.s32.totalorder %s18, 1
    %p76 = por %p74, %p75
    %p78 = scmp.ne.s32.totalorder %s63, %s77
    %p79 = scmp.eq.s32.totalorder %s18, 0
    %p80 = por %p78, %p79
    %s82 = sadd.s32 %s81, 1
    %p85 = scmp.eq.s32.totalorder %s12, 1
    %p86 = scmp.ne.s32.totalorder %s81, %s83
    %p87 = scmp.eq.s32.totalorder %s12, 0
    %p88 = por %p86, %p87
    %p89 = scmp.ne.s32.totalorder %s81, %s83
    %p90 = scmp.eq.s32.totalorder %s17, 1
    %p91 = por %p89, %p90
    %p92 = scmp.ne.s32.totalorder %s83, %s84
    %p93 = scmp.eq.s32.totalorder %s17, 0
    %p94 = por %p92, %p93
    %p95 = scmp.ne.s32.totalorder %s83, %s84
    %p96 = scmp.eq.s32.totalorder %s18, 1
    %p97 = por %p95, %p96
    %p99 = scmp.ne.s32.totalorder %s84, %s98
    %p100 = scmp.eq.s32.totalorder %s18, 0
    %p101 = por %p99, %p100
    %s102 = ssub.s32 %s19, %s31
    %s103 = ssub.s32 %s20, %s27
    %s104 = sor.u32 %s102, %s103
    %p105 = scmp.eq.s32.totalorder %s104, 0
    %s107 = sadd.s32 %s106, 1
    %s108 = scalar_select %p105, %s106, %s107
    %p111 = pneg %p105
    %p112 = scmp.eq.s32.totalorder %s12, 1
    %p113 = por %p111, %p112
    %p114 = scmp.ne.s32.totalorder %s106, %s109
    %p115 = scmp.eq.s32.totalorder %s12, 0
    %p116 = por %p114, %p115
    %p117 = scmp.ne.s32.totalorder %s106, %s109
    %p118 = scmp.eq.s32.totalorder %s17, 1
    %p119 = por %p117, %p118
    %p120 = scmp.ne.s32.totalorder %s109, %s110
    %p121 = scmp.eq.s32.totalorder %s17, 0
    %p122 = por %p120, %p121
    %p123 = scmp.ne.s32.totalorder %s109, %s110
    %p124 = scmp.eq.s32.totalorder %s18, 1
    %p125 = por %p123, %p124
    %p127 = scmp.ne.s32.totalorder %s110, %s126
    %p128 = scmp.eq.s32.totalorder %s18, 0
    %p129 = por %p127, %p128
    %s130 = ssub.s32 %s19, %s31
    %s131 = ssub.s32 %s20, %s27
    %s132 = sor.u32 %s130, %s131
    %p133 = scmp.eq.s32.totalorder %s132, 0
    %s135 = sadd.s32 %s134, 1
    %s136 = scalar_select %p133, %s134, %s135
    %p139 = pneg %p133
    %p140 = scmp.eq.s32.totalorder %s12, 1
    %p141 = por %p139, %p140
    %p142 = scmp.ne.s32.totalorder %s134, %s137
    %p143 = scmp.eq.s32.totalorder %s12, 0
    %p144 = por %p142, %p143
    %p145 = scmp.ne.s32.totalorder %s134, %s137
    %p146 = scmp.eq.s32.totalorder %s17, 1
    %p147 = por %p145, %p146
    %p148 = scmp.ne.s32.totalorder %s137, %s138
    %p149 = scmp.eq.s32.totalorder %s17, 0
    %p150 = por %p148, %p149
    %p151 = scmp.ne.s32.totalorder %s137, %s138
    %p152 = scmp.eq.s32.totalorder %s18, 1
    %p153 = por %p151, %p152
    %p155 = scmp.ne.s32.totalorder %s138, %s154
    %p156 = scmp.eq.s32.totalorder %s18, 0
    %p157 = por %p155, %p156
    %s158 = ssub.s32 %s19, %s31
    %s159 = ssub.s32 %s20, %s27
    %s160 = sor.u32 %s158, %s159
    %p161 = scmp.eq.s32.totalorder %s160, 0
    %s163 = sadd.s32 %s162, 1
    %s164 = scalar_select %p161, %s162, %s163
    %p167 = pneg %p161
    %p168 = scmp.eq.s32.totalorder %s12, 1
    %p169 = por %p167, %p168
    %p170 = scmp.ne.s32.totalorder %s162, %s165
    %p171 = scmp.eq.s32.totalorder %s12, 0
    %p172 = por %p170, %p171
    %p173 = scmp.ne.s32.totalorder %s162, %s165
    %p174 = scmp.eq.s32.totalorder %s17, 1
    %p175 = por %p173, %p174
    %p176 = scmp.ne.s32.totalorder %s165, %s166
    %p177 = scmp.eq.s32.totalorder %s17, 0
    %p178 = por %p176, %p177
    %p179 = scmp.ne.s32.totalorder %s165, %s166
    %p180 = scmp.eq.s32.totalorder %s18, 1
    %p181 = por %p179, %p180
    %p183 = scmp.ne.s32.totalorder %s166, %s182
    %p184 = scmp.eq.s32.totalorder %s18, 0
    %p185 = por %p183, %p184
    %p186 = scmp.le.s32.totalorder 1, %s12
    %p187 = scmp.lt.s32.totalorder %s12, 3
    %p188 = pnand %p186, %p187
    %p189 = pneg %p188
    // Predicated region
    $region9: #{self_attention_forward.2} parent=5 // pred_check
      _
    $region10: #{self_attention_forward.2} parent=5 // pred_check_branch
      %191 = sbr.rel (%p188) target = $region12
    $region11: #{self_attention_forward.2} parent=5 // pred_region
      %s192 = ssub.s32 %s12, 1
      // Predicated region
      $region13: #{self_attention_forward.2} parent=11 // pred_check
        %p193 = pneg %p73
      $region14: #{self_attention_forward.2} parent=11 // pred_check_branch
        %195 = sbr.rel (%p193) target = $region16
      $region15: #{self_attention_forward.2} parent=11 // pred_region
        _
      $region16: #{self_attention_forward.2} parent=11 // pred_fallthru
        _
      // Predicated region
      $region17: #{self_attention_forward.2} parent=11 // pred_check
        %p196 = pneg %p94
      $region18: #{self_attention_forward.2} parent=11 // pred_check_branch
        %198 = sbr.rel (%p196) target = $region20
      $region19: #{self_attention_forward.2} parent=11 // pred_region
        _
      $region20: #{self_attention_forward.2} parent=11 // pred_fallthru
        _
    $region12: #{self_attention_forward.2} parent=5 // pred_fallthru
      _
    %p199 = scmp.lt.s32.totalorder %s12, 2
    // Predicated region
    $region21: #{self_attention_forward.2} parent=5 // pred_check
      %p200 = pneg %p199
    $region22: #{self_attention_forward.2} parent=5 // pred_check_branch
      %202 = sbr.rel (%p200) target = $region24
    $region23: #{self_attention_forward.2} parent=5 // pred_region
      // Predicated region
      $region25: #{self_attention_forward.2} parent=23 // pred_check
        %p203 = pneg %p46
      $region26: #{self_attention_forward.2} parent=23 // pred_check_branch
        %205 = sbr.rel (%p203) target = $region28
      $region27: #{self_attention_forward.2} parent=23 // pred_region
        %s206 = smul.u32 2, %s20
        %p207 = scmp.lt.s32.totalorder %s19, 1
        %s208 = scalar_select %p207, %s19, 1
        %p209 = scmp.lt.s32.totalorder %s206, 1
        %s210 = scalar_select %p209, %s206, 1
        %s211 = smul.addr %s208, 32
        %s212 = sadd.s32 %s210, %s211
        %s213 = smul.addr %s212, 8
        %s214 = scalar_lea.vmem %s0, %s213
        %s215 = smul.u32 2, %s20
      $region28: #{self_attention_forward.2} parent=23 // pred_fallthru
        _
    $region24: #{self_attention_forward.2} parent=5 // pred_fallthru
      _
    %p216 = scmp.le.s32.totalorder 1, %s12
    %p217 = scmp.lt.s32.totalorder %s12, 3
    %p218 = pnand %p216, %p217
    %p219 = pneg %p218
    // Predicated region
    $region29: #{self_attention_forward.2} parent=5 // pred_check
      _
    $region30: #{self_attention_forward.2} parent=5 // pred_check_branch
      %221 = sbr.rel (%p218) target = $region32
    $region31: #{self_attention_forward.2} parent=5 // pred_region
      %s222 = ssub.s32 %s12, 1
      %s223 = smul.u32 2, %s22
      %p224 = scmp.lt.s32.totalorder %s21, 1
      %s225 = scalar_select %p224, %s21, 1
      %p226 = scmp.lt.s32.totalorder %s223, 1
      %s227 = scalar_select %p226, %s223, 1
      %s228 = smul.addr %s225, 32
      %s229 = sadd.s32 %s227, %s228
      %s230 = smul.addr %s229, 8
      %s231 = scalar_lea.vmem %s0, %s230
      %p232 = pneg %p52
      %p233 = pneg %p49
      %p234 = pneg %p73
      %p235 = pneg %p70
      %p236 = pneg %p94
      %p237 = pneg %p91
      %p238 = pneg %p122
      %p239 = pneg %p119
      %s240 = smul.u32 2, %s22
      %p241 = scmp.lt.s32.totalorder %s21, 1
      %s242 = scalar_select %p241, %s21, 1
      %p243 = scmp.lt.s32.totalorder %s240, 1
      %s244 = scalar_select %p243, %s240, 1
      %s245 = smul.addr %s242, 4
      %s246 = sadd.s32 %s244, %s245
      %s247 = smul.addr %s246, 4
      %s248 = scalar_lea.vmem %s3, %s247
      %p249 = pneg %p150
      %p250 = pneg %p147
      %s251 = smul.u32 2, %s22
      %p252 = scmp.lt.s32.totalorder %s21, 1
      %s253 = scalar_select %p252, %s21, 1
      %p254 = scmp.lt.s32.totalorder %s251, 1
      %s255 = scalar_select %p254, %s251, 1
      %s256 = smul.addr %s253, 32
      %s257 = sadd.s32 %s255, %s256
      %s258 = smul.addr %s257, 4
      %s259 = scalar_lea.vmem %s4, %s258
      %p260 = pneg %p178
      %p261 = pneg %p175
      %s262 = smul.u32 2, %s22
      %p263 = scmp.lt.s32.totalorder %s21, 1
      %s264 = scalar_select %p263, %s21, 1
      %p265 = scmp.lt.s32.totalorder %s262, 1
      %s266 = scalar_select %p265, %s262, 1
      %s267 = smul.addr %s264, 4
      %s268 = sadd.s32 %s266, %s267
      %s269 = smul.addr %s268, 4
      %s270 = scalar_lea.vmem %s5, %s269
      %s271 = smul.u32 2, %s22
      %p272 = scmp.lt.s32.totalorder %s21, 1
      %s273 = scalar_select %p272, %s21, 1
      %p274 = scmp.lt.s32.totalorder %s271, 1
      %s275 = scalar_select %p274, %s271, 1
      %s276 = smul.addr %s273, 32
      %s277 = sadd.s32 %s275, %s276
      %s278 = smul.addr %s277, 8
      %s279 = scalar_lea.vmem %s0, %s278
      %s280 = smul.u32 2, %s22
      %s281 = smul.u32 2, %s22
      %p282 = scmp.lt.s32.totalorder %s21, 1
      %s283 = scalar_select %p282, %s21, 1
      %p284 = scmp.lt.s32.totalorder %s281, 1
      %s285 = scalar_select %p284, %s281, 1
      %s286 = smul.addr %s283, 4
      %s287 = sadd.s32 %s285, %s286
      %s288 = smul.addr %s287, 4
      %s289 = scalar_lea.vmem %s3, %s288
      %s290 = smul.u32 2, %s22
      %s291 = smul.u32 2, %s22
      %p292 = scmp.lt.s32.totalorder %s21, 1
      %s293 = scalar_select %p292, %s21, 1
      %p294 = scmp.lt.s32.totalorder %s291, 1
      %s295 = scalar_select %p294, %s291, 1
      %s296 = smul.addr %s293, 32
      %s297 = sadd.s32 %s295, %s296
      %s298 = smul.addr %s297, 4
      %s299 = scalar_lea.vmem %s4, %s298
      %s300 = smul.u32 2, %s22
      %s301 = smul.u32 2, %s22
      %p302 = scmp.lt.s32.totalorder %s21, 1
      %s303 = scalar_select %p302, %s21, 1
      %p304 = scmp.lt.s32.totalorder %s301, 1
      %s305 = scalar_select %p304, %s301, 1
      %s306 = smul.addr %s303, 4
      %s307 = sadd.s32 %s305, %s306
      %s308 = smul.addr %s307, 4
      %s309 = scalar_lea.vmem %s5, %s308
      %s310 = smul.u32 2, %s22
      %v312 = vld [vmem:[%s279] sm:$0xff]
      %v313 = vld [vmem:[%s279 + $0x8] sm:$0xff]
      %v314 = vld [vmem:[%s279 + $0x10] sm:$0xff]
      %v315 = vld [vmem:[%s279 + $0x18] sm:$0xff]
      %v316 = vld [vmem:[%s279 + $0x20] sm:$0xff]
      %v317 = vld [vmem:[%s279 + $0x28] sm:$0xff]
      %v318 = vld [vmem:[%s279 + $0x30] sm:$0xff]
      %v319 = vld [vmem:[%s279 + $0x38] sm:$0xff]
      %v320 = vld [vmem:[%s279 + $0x40] sm:$0xff]
      %v321 = vld [vmem:[%s279 + $0x48] sm:$0xff]
      %v322 = vld [vmem:[%s279 + $0x50] sm:$0xff]
      %v323 = vld [vmem:[%s279 + $0x58] sm:$0xff]
      %v324 = vld [vmem:[%s279 + $0x60] sm:$0xff]
      %v325 = vld [vmem:[%s279 + $0x68] sm:$0xff]
      %v326 = vld [vmem:[%s279 + $0x70] sm:$0xff]
      %v327 = vld [vmem:[%s279 + $0x78] sm:$0xff]
      %v328 = vld [vmem:[%s279 + $0x80] sm:$0xff]
      %v329 = vld [vmem:[%s279 + $0x88] sm:$0xff]
      %v330 = vld [vmem:[%s279 + $0x90] sm:$0xff]
      %v331 = vld [vmem:[%s279 + $0x98] sm:$0xff]
      %v332 = vld [vmem:[%s279 + $0xa0] sm:$0xff]
      %v333 = vld [vmem:[%s279 + $0xa8] sm:$0xff]
      %v334 = vld [vmem:[%s279 + $0xb0] sm:$0xff]
      %v335 = vld [vmem:[%s279 + $0xb8] sm:$0xff]
      %v336 = vld [vmem:[%s279 + $0xc0] sm:$0xff]
      %v337 = vld [vmem:[%s279 + $0xc8] sm:$0xff]
      %v338 = vld [vmem:[%s279 + $0xd0] sm:$0xff]
      %v339 = vld [vmem:[%s279 + $0xd8] sm:$0xff]
      %v340 = vld [vmem:[%s279 + $0xe0] sm:$0xff]
      %v341 = vld [vmem:[%s279 + $0xe8] sm:$0xff]
      %v342 = vld [vmem:[%s279 + $0xf0] sm:$0xff]
      %v343 = vld [vmem:[%s279 + $0xf8] sm:$0xff]
      %v344 = vpack.c.bf16 %v314, %v312
      %v345 = vpack.c.bf16 %v315, %v313
      %v346 = vpack.c.bf16 %v318, %v316
      %v347 = vpack.c.bf16 %v319, %v317
      %v348 = vpack.c.bf16 %v322, %v320
      %v349 = vpack.c.bf16 %v323, %v321
      %v350 = vpack.c.bf16 %v326, %v324
      %v351 = vpack.c.bf16 %v327, %v325
      %v352 = vpack.c.bf16 %v330, %v328
      %v353 = vpack.c.bf16 %v331, %v329
      %v354 = vpack.c.bf16 %v334, %v332
      %v355 = vpack.c.bf16 %v335, %v333
      %v356 = vpack.c.bf16 %v338, %v336
      %v357 = vpack.c.bf16 %v339, %v337
      %v358 = vpack.c.bf16 %v342, %v340
      %v359 = vpack.c.bf16 %v343, %v341
      %v360 = vld [vmem:[%s1] sm:$0xf]
      %v361 = vld [vmem:[%s1 + $0x4] sm:$0xf]
      %v362 = vld [vmem:[%s1 + $0x8] sm:$0xf]
      %v363 = vld [vmem:[%s1 + $0xc] sm:$0xf]
      %v364 = vld [vmem:[%s1 + $0x10] sm:$0xf]
      %v365 = vld [vmem:[%s1 + $0x14] sm:$0xf]
      %v366 = vld [vmem:[%s1 + $0x18] sm:$0xf]
      %v367 = vld [vmem:[%s1 + $0x1c] sm:$0xf]
      %v368 = vld [vmem:[%s1 + $0x20] sm:$0xf]
      %v369 = vld [vmem:[%s1 + $0x24] sm:$0xf]
      %v370 = vld [vmem:[%s1 + $0x28] sm:$0xf]
      %v371 = vld [vmem:[%s1 + $0x2c] sm:$0xf]
      %v372 = vld [vmem:[%s1 + $0x30] sm:$0xf]
      %v373 = vld [vmem:[%s1 + $0x34] sm:$0xf]
      %v374 = vld [vmem:[%s1 + $0x38] sm:$0xf]
      %v375 = vld [vmem:[%s1 + $0x3c] sm:$0xf]
      %v376 = vld [vmem:[%s1 + $0x40] sm:$0xf]
      %v377 = vld [vmem:[%s1 + $0x44] sm:$0xf]
      %v378 = vld [vmem:[%s1 + $0x48] sm:$0xf]
      %v379 = vld [vmem:[%s1 + $0x4c] sm:$0xf]
      %v380 = vld [vmem:[%s2] sm:$0xff]
      %v381 = vld [vmem:[%s2 + $0x8] sm:$0xff]
      %v382 = vld [vmem:[%s2 + $0x10] sm:$0xff]
      %v383 = vld [vmem:[%s2 + $0x18] sm:$0xff]
      %v384 = vld [vmem:[%s2 + $0x20] sm:$0xff]
      %v385 = vld [vmem:[%s2 + $0x28] sm:$0xff]
      %v386 = vld [vmem:[%s2 + $0x30] sm:$0xff]
      %v387 = vld [vmem:[%s2 + $0x38] sm:$0xff]
      %v388 = vld [vmem:[%s2 + $0x40] sm:$0xff]
      %v389 = vld [vmem:[%s2 + $0x48] sm:$0xff]
      %v390 = vld [vmem:[%s2 + $0x50] sm:$0xff]
      %v391 = vld [vmem:[%s2 + $0x58] sm:$0xff]
      %v392 = vld [vmem:[%s2 + $0x60] sm:$0xff]
      %v393 = vld [vmem:[%s2 + $0x68] sm:$0xff]
      %v394 = vld [vmem:[%s2 + $0x70] sm:$0xff]
      %v395 = vld [vmem:[%s2 + $0x78] sm:$0xff]
      %v396 = vld [vmem:[%s2 + $0x80] sm:$0xff]
      %v397 = vld [vmem:[%s2 + $0x88] sm:$0xff]
      %v398 = vld [vmem:[%s2 + $0x90] sm:$0xff]
      %v399 = vld [vmem:[%s2 + $0x98] sm:$0xff]
      %401 = vset.pattern.permute.xlu0 0
      %402 = vperm.xlu0 %401, %v380
      %v403 = vpop.permute.xlu0 %402
      %406 = vset.pattern.permute.xlu0 0
      %407 = vperm.xlu0 %406, %v381
      %v408 = vpop.permute.xlu0 %407
      %411 = vset.pattern.permute.xlu0 0
      %412 = vperm.xlu0 %411, %v382
      %v413 = vpop.permute.xlu0 %412
      %416 = vset.pattern.permute.xlu0 0
      %417 = vperm.xlu0 %416, %v383
      %v418 = vpop.permute.xlu0 %417
      %421 = vset.pattern.permute.xlu0 0
      %422 = vperm.xlu0 %421, %v384
      %v423 = vpop.permute.xlu0 %422
      %426 = vset.pattern.permute.xlu0 0
      %427 = vperm.xlu0 %426, %v385
      %v428 = vpop.permute.xlu0 %427
      %431 = vset.pattern.permute.xlu0 0
      %432 = vperm.xlu0 %431, %v386
      %v433 = vpop.permute.xlu0 %432
      %436 = vset.pattern.permute.xlu0 0
      %437 = vperm.xlu0 %436, %v387
      %v438 = vpop.permute.xlu0 %437
      %441 = vset.pattern.permute.xlu0 0
      %442 = vperm.xlu0 %441, %v388
      %v443 = vpop.permute.xlu0 %442
      %446 = vset.pattern.permute.xlu0 0
      %447 = vperm.xlu0 %446, %v389
      %v448 = vpop.permute.xlu0 %447
      %451 = vset.pattern.permute.xlu0 0
      %452 = vperm.xlu0 %451, %v390
      %v453 = vpop.permute.xlu0 %452
      %456 = vset.pattern.permute.xlu0 0
      %457 = vperm.xlu0 %456, %v391
      %v458 = vpop.permute.xlu0 %457
      %461 = vset.pattern.permute.xlu0 0
      %462 = vperm.xlu0 %461, %v392
      %v463 = vpop.permute.xlu0 %462
      %466 = vset.pattern.permute.xlu0 0
      %467 = vperm.xlu0 %466, %v393
      %v468 = vpop.permute.xlu0 %467
      %471 = vset.pattern.permute.xlu0 0
      %472 = vperm.xlu0 %471, %v394
      %v473 = vpop.permute.xlu0 %472
      %476 = vset.pattern.permute.xlu0 0
      %477 = vperm.xlu0 %476, %v395
      %v478 = vpop.permute.xlu0 %477
      %481 = vset.pattern.permute.xlu0 0
      %482 = vperm.xlu0 %481, %v396
      %v483 = vpop.permute.xlu0 %482
      %486 = vset.pattern.permute.xlu0 0
      %487 = vperm.xlu0 %486, %v397
      %v488 = vpop.permute.xlu0 %487
      %491 = vset.pattern.permute.xlu0 0
      %492 = vperm.xlu0 %491, %v398
      %v493 = vpop.permute.xlu0 %492
      %496 = vset.pattern.permute.xlu0 0
      %497 = vperm.xlu0 %496, %v399
      %v498 = vpop.permute.xlu0 %497
      %v520 = vunpack.c.l.b16 %v360
      %v521 = vunpack.c.l.b16 %v361
      %v522 = vunpack.c.l.b16 %v362
      %v523 = vunpack.c.l.b16 %v363
      %v524 = vunpack.c.l.b16 %v364
      %v525 = vunpack.c.l.b16 %v365
      %v526 = vunpack.c.l.b16 %v366
      %v527 = vunpack.c.l.b16 %v367
      %v528 = vunpack.c.l.b16 %v368
      %v529 = vunpack.c.l.b16 %v369
      %v530 = vunpack.c.l.b16 %v370
      %v531 = vunpack.c.l.b16 %v371
      %v532 = vunpack.c.l.b16 %v372
      %v533 = vunpack.c.l.b16 %v373
      %v534 = vunpack.c.l.b16 %v374
      %v535 = vunpack.c.l.b16 %v375
      %v536 = vunpack.c.l.b16 %v376
      %v537 = vunpack.c.l.b16 %v377
      %v538 = vunpack.c.l.b16 %v378
      %v539 = vunpack.c.l.b16 %v379
      %v540 = vpack.c.b16 %v521, %v520
      %v541 = vpack.c.b16 %v523, %v522
      %v542 = vpack.c.b16 %v525, %v524
      %v543 = vpack.c.b16 %v527, %v526
      %v544 = vpack.c.b16 %v529, %v528
      %v545 = vpack.c.b16 %v531, %v530
      %v546 = vpack.c.b16 %v533, %v532
      %v547 = vpack.c.b16 %v535, %v534
      %v548 = vpack.c.b16 %v537, %v536
      %v549 = vpack.c.b16 %v539, %v538
      %560 = vmatprep.subr.bf16.mxu0 %v345
      %561 = vmatpush1.bf16.msra.mxu0 %v344
      %562 = vmatprep.subr.bf16.mxu0 %v347
      %563 = vmatpush1.bf16.msra.mxu0 %v346
      %564 = vmatprep.subr.bf16.mxu0 %v349
      %565 = vmatpush1.bf16.msra.mxu0 %v348
      %566 = vmatprep.subr.bf16.mxu0 %v351
      %567 = vmatpush1.bf16.msra.mxu0 %v350
      %568 = vmatprep.subr.bf16.mxu0 %v353
      %569 = vmatpush1.bf16.msra.mxu0 %v352
      %570 = vmatprep.subr.bf16.mxu0 %v355
      %571 = vmatpush1.bf16.msra.mxu0 %v354
      %572 = vmatprep.subr.bf16.mxu0 %v357
      %573 = vmatpush1.bf16.msra.mxu0 %v356
      %574 = vmatprep.subr.bf16.mxu0 %v359
      %575 = vmatpush1.bf16.msra.mxu0 %v358
      %576 = vmatprep.subr.bf16.mxu0 0
      %577 = vmatpush1.bf16.msra.mxu0 0
      %578 = vmatprep.subr.bf16.mxu0 0
      %579 = vmatpush1.bf16.msra.mxu0 0
      %580 = vmatprep.subr.bf16.mxu0 0
      %581 = vmatpush1.bf16.msra.mxu0 0
      %582 = vmatprep.subr.bf16.mxu0 0
      %583 = vmatpush1.bf16.msra.mxu0 0
      %584 = vmatprep.subr.bf16.mxu0 0
      %585 = vmatpush1.bf16.msra.mxu0 0
      %586 = vmatprep.subr.bf16.mxu0 0
      %587 = vmatpush1.bf16.msra.mxu0 0
      %588 = vmatprep.subr.bf16.mxu0 0
      %589 = vmatpush1.bf16.msra.mxu0 0
      %590 = vmatprep.subr.bf16.mxu0 0
      %591 = vmatpush1.bf16.msra.mxu0 0
      %592 = vmatprep.mubr.bf16.mxu0 0
      %593 = vmatmul.mubr.bf16.gmra.mrb[0].mxu0 %v540
      %v594 = vpop.f32.mrb[0].mxu0
      %v595 = vadd.f32 %v403, %v594
      %v596 = vpop.f32.mrb[0].mxu0
      %v597 = vadd.f32 %v403, %v596
      %v598 = vpop.f32.mrb[0].mxu0
      %v599 = vadd.f32 %v408, %v598
      %v600 = vpop.f32.mrb[0].mxu0
      %v601 = vadd.f32 %v408, %v600
      %602 = vmatprep.mubr.bf16.mxu0 0
      %603 = vmatmul.mubr.bf16.gmra.mrb[0].mxu0 %v541
      %v604 = vpop.f32.mrb[0].mxu0
      %v605 = vadd.f32 %v413, %v604
      %v606 = vpop.f32.mrb[0].mxu0
      %v607 = vadd.f32 %v413, %v606
      %v608 = vpop.f32.mrb[0].mxu0
      %v609 = vadd.f32 %v418, %v608
      %v610 = vpop.f32.mrb[0].mxu0
      %v611 = vadd.f32 %v418, %v610
      %612 = vmatprep.mubr.bf16.mxu0 0
      %613 = vmatmul.mubr.bf16.gmra.mrb[0].mxu0 %v542
      %v614 = vpop.f32.mrb[0].mxu0
      %v615 = vadd.f32 %v423, %v614
      %v616 = vpop.f32.mrb[0].mxu0
      %v617 = vadd.f32 %v423, %v616
      %v618 = vpop.f32.mrb[0].mxu0
      %v619 = vadd.f32 %v428, %v618
      %v620 = vpop.f32.mrb[0].mxu0
      %v621 = vadd.f32 %v428, %v620
      %622 = vmatprep.mubr.bf16.mxu0 0
      %623 = vmatmul.mubr.bf16.gmra.mrb[0].mxu0 %v543
      %v624 = vpop.f32.mrb[0].mxu0
      %v625 = vadd.f32 %v433, %v624
      %v626 = vpop.f32.mrb[0].mxu0
      %v627 = vadd.f32 %v433, %v626
      %v628 = vpop.f32.mrb[0].mxu0
      %v629 = vadd.f32 %v438, %v628
      %v630 = vpop.f32.mrb[0].mxu0
      %v631 = vadd.f32 %v438, %v630
      %632 = vmatprep.mubr.bf16.mxu0 0
      %633 = vmatmul.mubr.bf16.gmra.mrb[0].mxu0 %v544
      %v634 = vpop.f32.mrb[0].mxu0
      %v635 = vadd.f32 %v443, %v634
      %v636 = vpop.f32.mrb[0].mxu0
      %v637 = vadd.f32 %v443, %v636
      %v638 = vpop.f32.mrb[0].mxu0
      %v639 = vadd.f32 %v448, %v638
      %v640 = vpop.f32.mrb[0].mxu0
      %v641 = vadd.f32 %v448, %v640
      %642 = vmatprep.mubr.bf16.mxu0 0
      %643 = vmatmul.mubr.bf16.gmra.mrb[0].mxu0 %v545
      %v644 = vpop.f32.mrb[0].mxu0
      %v645 = vadd.f32 %v453, %v644
      %v646 = vpop.f32.mrb[0].mxu0
      %v647 = vadd.f32 %v453, %v646
      %v648 = vpop.f32.mrb[0].mxu0
      %v649 = vadd.f32 %v458, %v648
      %v650 = vpop.f32.mrb[0].mxu0
      %v651 = vadd.f32 %v458, %v650
      %652 = vmatprep.mubr.bf16.mxu0 0
      %653 = vmatmul.mubr.bf16.gmra.mrb[0].mxu0 %v546
      %v654 = vpop.f32.mrb[0].mxu0
      %v655 = vadd.f32 %v463, %v654
      %v656 = vpop.f32.mrb[0].mxu0
      %v657 = vadd.f32 %v463, %v656
      %v658 = vpop.f32.mrb[0].mxu0
      %v659 = vadd.f32 %v468, %v658
      %v660 = vpop.f32.mrb[0].mxu0
      %v661 = vadd.f32 %v468, %v660
      %662 = vmatprep.mubr.bf16.mxu0 0
      %663 = vmatmul.mubr.bf16.gmra.mrb[0].mxu0 %v547
      %v664 = vpop.f32.mrb[0].mxu0
      %v665 = vadd.f32 %v473, %v664
      %v666 = vpop.f32.mrb[0].mxu0
      %v667 = vadd.f32 %v473, %v666
      %v668 = vpop.f32.mrb[0].mxu0
      %v669 = vadd.f32 %v478, %v668
      %v670 = vpop.f32.mrb[0].mxu0
      %v671 = vadd.f32 %v478, %v670
      %672 = vmatprep.mubr.bf16.mxu0 0
      %673 = vmatmul.mubr.bf16.gmra.mrb[0].mxu0 %v548
      %v674 = vpop.f32.mrb[0].mxu0
      %v675 = vadd.f32 %v483, %v674
      %v676 = vpop.f32.mrb[0].mxu0
      %v677 = vadd.f32 %v483, %v676
      %v678 = vpop.f32.mrb[0].mxu0
      %v679 = vadd.f32 %v488, %v678
      %v680 = vpop.f32.mrb[0].mxu0
      %v681 = vadd.f32 %v488, %v680
      %682 = vmatprep.mubr.bf16.mxu0 0
      %683 = vmatmul.mubr.bf16.gmra.mrb[0].mxu0 %v549
      %v684 = vpop.f32.mrb[0].mxu0
      %v685 = vadd.f32 %v493, %v684
      %v686 = vpop.f32.mrb[0].mxu0
      %v687 = vadd.f32 %v493, %v686
      %v688 = vpop.f32.mrb[0].mxu0
      %v689 = vadd.f32 %v498, %v688
      %v690 = vpop.f32.mrb[0].mxu0
      %v691 = vadd.f32 %v498, %v690
      %692 = vdwg.mxu0
      %v693 = vmax.f32 %v595, 0.0
      %v694 = vmax.f32 %v597, 0.0
      %v695 = vmax.f32 %v599, 0.0
      %v696 = vmax.f32 %v601, 0.0
      %v697 = vmax.f32 %v605, 0.0
      %v698 = vmax.f32 %v607, 0.0
      %v699 = vmax.f32 %v609, 0.0
      %v700 = vmax.f32 %v611, 0.0
      %v701 = vmax.f32 %v615, 0.0
      %v702 = vmax.f32 %v617, 0.0
      %v703 = vmax.f32 %v619, 0.0
      %v704 = vmax.f32 %v621, 0.0
      %v705 = vmax.f32 %v625, 0.0
      %v706 = vmax.f32 %v627, 0.0
      %v707 = vmax.f32 %v629, 0.0
      %v708 = vmax.f32 %v631, 0.0
      %v709 = vmax.f32 %v635, 0.0
      %v710 = vmax.f32 %v637, 0.0
      %v711 = vmax.f32 %v639, 0.0
      %v712 = vmax.f32 %v641, 0.0
      %v713 = vmax.f32 %v645, 0.0
      %v714 = vmax.f32 %v647, 0.0
      %v715 = vmax.f32 %v649, 0.0
      %v716 = vmax.f32 %v651, 0.0
      %v717 = vmax.f32 %v655, 0.0
      %v718 = vmax.f32 %v657, 0.0
      %v719 = vmax.f32 %v659, 0.0
      %v720 = vmax.f32 %v661, 0.0
      %v721 = vmax.f32 %v665, 0.0
      %v722 = vmax.f32 %v667, 0.0
      %v723 = vmax.f32 %v669, 0.0
      %v724 = vmax.f32 %v671, 0.0
      %v725 = vmax.f32 %v675, 0.0
      %v726 = vmax.f32 %v677, 0.0
      %v727 = vmax.f32 %v679, 0.0
      %v728 = vmax.f32 %v681, 0.0
      %v729 = vmax.f32 %v685, 0.0
      %v730 = vmax.f32 %v687, 0.0
      %v731 = vmax.f32 %v689, 0.0
      %v732 = vmax.f32 %v691, 0.0
      %v733 = vpack.c.bf16 %v695, %v693
      %v734 = vpack.c.bf16 %v696, %v694
      %v737 = vunpack.c.l.b16 %v733
      %v738 = vunpack.c.l.b16 %v734
      %v739 = vunpack.c.h.b16 %v733
      %v740 = vunpack.c.h.b16 %v734
      %v741 = vpack.c.b16 %v738, %v737
      %v742 = vpack.c.b16 %v740, %v739
      %745 = vst [vmem:[%s289] sm:$0xff] %v741
      %746 = vst [vmem:[%s289 + $0x8] sm:$0xff] %v742
      %v747 = vpack.c.bf16 %v699, %v697
      %v748 = vpack.c.bf16 %v700, %v698
      %v749 = vpack.c.bf16 %v703, %v701
      %v750 = vpack.c.bf16 %v704, %v702
      %v751 = vpack.c.bf16 %v707, %v705
      %v752 = vpack.c.bf16 %v708, %v706
      %v753 = vpack.c.bf16 %v711, %v709
      %v754 = vpack.c.bf16 %v712, %v710
      %v755 = vpack.c.bf16 %v715, %v713
      %v756 = vpack.c.bf16 %v716, %v714
      %v757 = vpack.c.bf16 %v719, %v717
      %v758 = vpack.c.bf16 %v720, %v718
      %v759 = vpack.c.bf16 %v723, %v721
      %v760 = vpack.c.bf16 %v724, %v722
      %v761 = vpack.c.bf16 %v727, %v725
      %v762 = vpack.c.bf16 %v728, %v726
      %v779 = vunpack.c.l.b16 %v747
      %v780 = vunpack.c.l.b16 %v748
      %v781 = vunpack.c.h.b16 %v747
      %v782 = vunpack.c.h.b16 %v748
      %v783 = vunpack.c.l.b16 %v749
      %v784 = vunpack.c.l.b16 %v750
      %v785 = vunpack.c.h.b16 %v749
      %v786 = vunpack.c.h.b16 %v750
      %v787 = vunpack.c.l.b16 %v751
      %v788 = vunpack.c.l.b16 %v752
      %v789 = vunpack.c.h.b16 %v751
      %v790 = vunpack.c.h.b16 %v752
      %v791 = vunpack.c.l.b16 %v753
      %v792 = vunpack.c.l.b16 %v754
      %v793 = vunpack.c.h.b16 %v753
      %v794 = vunpack.c.h.b16 %v754
      %v795 = vunpack.c.l.b16 %v755
      %v796 = vunpack.c.l.b16 %v756
      %v797 = vunpack.c.h.b16 %v755
      %v798 = vunpack.c.h.b16 %v756
      %v799 = vunpack.c.l.b16 %v757
      %v800 = vunpack.c.l.b16 %v758
      %v801 = vunpack.c.h.b16 %v757
      %v802 = vunpack.c.h.b16 %v758
      %v803 = vunpack.c.l.b16 %v759
      %v804 = vunpack.c.l.b16 %v760
      %v805 = vunpack.c.h.b16 %v759
      %v806 = vunpack.c.h.b16 %v760
      %v807 = vunpack.c.l.b16 %v761
      %v808 = vunpack.c.l.b16 %v762
      %v809 = vunpack.c.h.b16 %v761
      %v810 = vunpack.c.h.b16 %v762
      %v811 = vpack.c.b16 %v780, %v779
      %v812 = vpack.c.b16 %v782, %v781
      %v813 = vpack.c.b16 %v784, %v783
      %v814 = vpack.c.b16 %v786, %v785
      %v815 = vpack.c.b16 %v788, %v787
      %v816 = vpack.c.b16 %v790, %v789
      %v817 = vpack.c.b16 %v792, %v791
      %v818 = vpack.c.b16 %v794, %v793
      %v819 = vpack.c.b16 %v796, %v795
      %v820 = vpack.c.b16 %v798, %v797
      %v821 = vpack.c.b16 %v800, %v799
      %v822 = vpack.c.b16 %v802, %v801
      %v823 = vpack.c.b16 %v804, %v803
      %v824 = vpack.c.b16 %v806, %v805
      %v825 = vpack.c.b16 %v808, %v807
      %v826 = vpack.c.b16 %v810, %v809
      %843 = vst [vmem:[%s299] sm:$0xff] %v811
      %844 = vst [vmem:[%s299 + $0x8] sm:$0xff] %v812
      %845 = vst [vmem:[%s299 + $0x10] sm:$0xff] %v813
      %846 = vst [vmem:[%s299 + $0x18] sm:$0xff] %v814
      %847 = vst [vmem:[%s299 + $0x20] sm:$0xff] %v815
      %848 = vst [vmem:[%s299 + $0x28] sm:$0xff] %v816
      %849 = vst [vmem:[%s299 + $0x30] sm:$0xff] %v817
      %850 = vst [vmem:[%s299 + $0x38] sm:$0xff] %v818
      %851 = vst [vmem:[%s299 + $0x40] sm:$0xff] %v819
      %852 = vst [vmem:[%s299 + $0x48] sm:$0xff] %v820
      %853 = vst [vmem:[%s299 + $0x50] sm:$0xff] %v821
      %854 = vst [vmem:[%s299 + $0x58] sm:$0xff] %v822
      %855 = vst [vmem:[%s299 + $0x60] sm:$0xff] %v823
      %856 = vst [vmem:[%s299 + $0x68] sm:$0xff] %v824
      %857 = vst [vmem:[%s299 + $0x70] sm:$0xff] %v825
      %858 = vst [vmem:[%s299 + $0x78] sm:$0xff] %v826
      %v859 = vpack.c.bf16 %v731, %v729
      %v860 = vpack.c.bf16 %v732, %v730
      %v863 = vunpack.c.l.b16 %v859
      %v864 = vunpack.c.l.b16 %v860
      %v865 = vunpack.c.h.b16 %v859
      %v866 = vunpack.c.h.b16 %v860
      %v867 = vpack.c.b16 %v864, %v863
      %v868 = vpack.c.b16 %v866, %v865
      %871 = vst [vmem:[%s309] sm:$0xff] %v867
      %872 = vst [vmem:[%s309 + $0x8] sm:$0xff] %v868
      %s873 = smul.u32 2, %s22
      %p874 = scmp.lt.s32.totalorder %s21, 1
      %s875 = scalar_select %p874, %s21, 1
      %p876 = scmp.lt.s32.totalorder %s873, 1
      %s877 = scalar_select %p876, %s873, 1
      %s878 = smul.addr %s875, 4
      %s879 = sadd.s32 %s877, %s878
      %s880 = smul.addr %s879, 4
      %s881 = scalar_lea.vmem %s3, %s880
      %s882 = smul.u32 2, %s22
      %p883 = scmp.lt.s32.totalorder %s21, 1
      %s884 = scalar_select %p883, %s21, 1
      %p885 = scmp.lt.s32.totalorder %s882, 1
      %s886 = scalar_select %p885, %s882, 1
      %s887 = smul.addr %s884, 32
      %s888 = sadd.s32 %s886, %s887
      %s889 = smul.addr %s888, 4
      %s890 = scalar_lea.vmem %s4, %s889
      %s891 = smul.u32 2, %s22
      %p892 = scmp.lt.s32.totalorder %s21, 1
      %s893 = scalar_select %p892, %s21, 1
      %p894 = scmp.lt.s32.totalorder %s891, 1
      %s895 = scalar_select %p894, %s891, 1
      %s896 = smul.addr %s893, 4
      %s897 = sadd.s32 %s895, %s896
      %s898 = smul.addr %s897, 4
      %s899 = scalar_lea.vmem %s5, %s898
      // Predicated region
      $region33: #{self_attention_forward.2} parent=31 // pred_check
        %p900 = pneg %p119
      $region34: #{self_attention_forward.2} parent=31 // pred_check_branch
        %902 = sbr.rel (%p900) target = $region36
      $region35: #{self_attention_forward.2} parent=31 // pred_region
        %s903 = smul.u32 2, %s22
      $region36: #{self_attention_forward.2} parent=31 // pred_fallthru
        _
      // Predicated region
      $region37: #{self_attention_forward.2} parent=31 // pred_check
        %p904 = pneg %p147
      $region38: #{self_attention_forward.2} parent=31 // pred_check_branch
        %906 = sbr.rel (%p904) target = $region40
      $region39: #{self_attention_forward.2} parent=31 // pred_region
        %s907 = smul.u32 2, %s22
      $region40: #{self_attention_forward.2} parent=31 // pred_fallthru
        _
      // Predicated region
      $region41: #{self_attention_forward.2} parent=31 // pred_check
        %p908 = pneg %p175
      $region42: #{self_attention_forward.2} parent=31 // pred_check_branch
        %910 = sbr.rel (%p908) target = $region44
      $region43: #{self_attention_forward.2} parent=31 // pred_region
        %s911 = smul.u32 2, %s22
      $region44: #{self_attention_forward.2} parent=31 // pred_fallthru
        _
    $region32: #{self_attention_forward.2} parent=5 // pred_fallthru
      _
    %p912 = scmp.le.s32.totalorder 2, %s12
    // Predicated region
    $region45: #{self_attention_forward.2} parent=5 // pred_check
      %p913 = pneg %p912
    $region46: #{self_attention_forward.2} parent=5 // pred_check_branch
      %915 = sbr.rel (%p913) target = $region48
    $region47: #{self_attention_forward.2} parent=5 // pred_region
      %s916 = ssub.s32 %s12, 2
      // Predicated region
      $region49: #{self_attention_forward.2} parent=47 // pred_check
        %p917 = pneg %p125
      $region50: #{self_attention_forward.2} parent=47 // pred_check_branch
        %919 = sbr.rel (%p917) target = $region52
      $region51: #{self_attention_forward.2} parent=47 // pred_region
        %s920 = smul.u32 2, %s24
        %p921 = scmp.lt.s32.totalorder %s23, 1
        %s922 = scalar_select %p921, %s23, 1
        %p923 = scmp.lt.s32.totalorder %s920, 1
        %s924 = scalar_select %p923, %s920, 1
        %s925 = smul.addr %s922, 4
        %s926 = sadd.s32 %s924, %s925
        %s927 = smul.addr %s926, 4
        %s928 = scalar_lea.vmem %s3, %s927
      $region52: #{self_attention_forward.2} parent=47 // pred_fallthru
        _
      // Predicated region
      $region53: #{self_attention_forward.2} parent=47 // pred_check
        %p929 = pneg %p153
      $region54: #{self_attention_forward.2} parent=47 // pred_check_branch
        %931 = sbr.rel (%p929) target = $region56
      $region55: #{self_attention_forward.2} parent=47 // pred_region
        %s932 = smul.u32 2, %s24
        %p933 = scmp.lt.s32.totalorder %s23, 1
        %s934 = scalar_select %p933, %s23, 1
        %p935 = scmp.lt.s32.totalorder %s932, 1
        %s936 = scalar_select %p935, %s932, 1
        %s937 = smul.addr %s934, 32
        %s938 = sadd.s32 %s936, %s937
        %s939 = smul.addr %s938, 4
        %s940 = scalar_lea.vmem %s4, %s939
      $region56: #{self_attention_forward.2} parent=47 // pred_fallthru
        _
      // Predicated region
      $region57: #{self_attention_forward.2} parent=47 // pred_check
        %p941 = pneg %p181
      $region58: #{self_attention_forward.2} parent=47 // pred_check_branch
        %943 = sbr.rel (%p941) target = $region60
      $region59: #{self_attention_forward.2} parent=47 // pred_region
        %s944 = smul.u32 2, %s24
        %p945 = scmp.lt.s32.totalorder %s23, 1
        %s946 = scalar_select %p945, %s23, 1
        %p947 = scmp.lt.s32.totalorder %s944, 1
        %s948 = scalar_select %p947, %s944, 1
        %s949 = smul.addr %s946, 4
        %s950 = sadd.s32 %s948, %s949
        %s951 = smul.addr %s950, 4
        %s952 = scalar_lea.vmem %s5, %s951
      $region60: #{self_attention_forward.2} parent=47 // pred_fallthru
        _
    $region48: #{self_attention_forward.2} parent=5 // pred_fallthru
      _
  $region6: #{self_attention_forward.2} parent=0 // loop_footer
    %s16 = sadd.s32 1, %s12
  $region7: #{self_attention_forward.2} parent=0 // loop_footer_branch
    %11 = sbr.rel target = $region3
  $region8: #{self_attention_forward.2} parent=0 // loop_exit
    _

// kernel: self_attention_forward.3
$region0: #{self_attention_forward.3}
  #allocation0 [shape = 'u32[]', space=smem, size = 0x4, offset = 0x4, fixed_abs, tag = 'smem constant byte address 0x4 - core index']
  #allocation1 [shape = 'u32[144,128]{1,0:T(1,128)}', space=vmem, size = 0x12000, scoped, tag = 'internal scratch']
  #allocation2 [shape = 'f32[16,128]{1,0:T(8,128)}', space=vmem, size = 0x2000, scoped, tag = 'scratch operand']
  #allocation3 [shape = 'f32[1]{0:T(128)S(6)}', space=smem, size = 0x200, scoped, tag = 'scoped memory for self_attention_forward.3']
  %s0 = inlined_call_operand.<no memory space> [shape: f32[1], index: 0, kind: input, shape index: {}]
  %s1 = inlined_call_operand.vmem [shape: bf16[2,16,256], index: 1, kind: input, shape index: {}]
  %s2 = inlined_call_operand.vmem [shape: bf16[2,256,128], index: 2, kind: input, shape index: {}]
  %s3 = inlined_call_operand.vmem [shape: bf16[2,256,16], index: 3, kind: input, shape index: {}]
  %s4 = inlined_call_operand.vmem [shape: f32[2,256,128], index: 4, kind: input, shape index: {}]
  %s5 = inlined_call_operand.vmem [shape: f32[2,256,128], index: 5, kind: output, shape index: {}]
  %s6 = sld [smem:[#allocation0]]
  $region65: #{self_attention_forward.3} parent=0
    _
  %s8 = ssub.s32 1, %s6
  %s9 = scalar_select 0, %s8, %s6
  %10 = sst [smem:[#allocation3]] %s0
  loop: start=0, step=1, limit=6
  $region2: #{self_attention_forward.3} parent=0 // loop_pre_header
    _
  $region3: #{self_attention_forward.3} parent=0 // loop_header
    %s12 = sphi 0, %s16
    %p13 = scmp.ge.s32.totalorder %s12, 6
    %s19 = sphi 0, %s38
    %s20 = sphi 0, %s34
    %s21 = sphi 0, %s30
    %s22 = sphi 0, %s19
    %s23 = sphi 0, %s20
    %s24 = sphi 0, %s21
    %s25 = sphi 0, %s22
    %s26 = sphi 0, %s23
    %s27 = sphi 0, %s24
    %s39 = sphi 0, %s39
    %s41 = sphi 0, %s39
    %s42 = sphi 0, %s41
    %s56 = sphi 0, %s42
    %s68 = sphi 0, %s70
    %s71 = sphi 0, %s68
    %s72 = sphi 0, %s71
    %s88 = sphi 0, %s72
    %s100 = sphi 0, %s102
    %s103 = sphi 0, %s100
    %s104 = sphi 0, %s103
    %s120 = sphi 0, %s104
    %s130 = sphi 0, %s132
    %s133 = sphi 0, %s130
    %s134 = sphi 0, %s133
    %s150 = sphi 0, %s134
    %s160 = sphi 0, %s162
    %s163 = sphi 0, %s160
    %s164 = sphi 0, %s163
    %s180 = sphi 0, %s164
    %s190 = sphi 0, %s192
    %s193 = sphi 0, %s190
    %s194 = sphi 0, %s193
    %s210 = sphi 0, %s194
  $region4: #{self_attention_forward.3} parent=0 // loop_header_branch
    %15 = sbr.rel (%p13) target = $region8
  $region5: #{self_attention_forward.3} parent=0 // loop_body
    %s17 = ssub.s32 %s12, 1
    %s18 = ssub.s32 %s12, 2
    %s28 = sadd.s32 1, %s21
    %p29 = scmp.ge.s32.totalorder %s28, 1
    %s30 = scalar_select %p29, 0, %s28
    %s31 = sadd.s32 1, %s20
    %s32 = scalar_select %p29, %s31, %s20
    %p33 = scmp.ge.s32.totalorder %s32, 2
    %s34 = scalar_select %p33, 0, %s32
    %s35 = sadd.s32 1, %s19
    %s36 = scalar_select %p33, %s35, %s19
    %p37 = scmp.ge.s32.totalorder %s36, 2
    %s38 = scalar_select %p37, 0, %s36
    %s40 = sadd.s32 %s39, 1
    %p43 = scmp.eq.s32.totalorder %s12, 3
    %p44 = scmp.ne.s32.totalorder %s39, %s41
    %p45 = scmp.eq.s32.totalorder %s12, 0
    %p46 = por %p44, %p45
    %p47 = scmp.ne.s32.totalorder %s39, %s41
    %p48 = scmp.eq.s32.totalorder %s17, 3
    %p49 = por %p47, %p48
    %p50 = scmp.ne.s32.totalorder %s41, %s42
    %p51 = scmp.eq.s32.totalorder %s17, 0
    %p52 = por %p50, %p51
    %p53 = scmp.ne.s32.totalorder %s41, %s42
    %p54 = scmp.eq.s32.totalorder %s18, 3
    %p55 = por %p53, %p54
    %p57 = scmp.ne.s32.totalorder %s42, %s56
    %p58 = scmp.eq.s32.totalorder %s18, 0
    %p59 = por %p57, %p58
    %s60 = ssub.s32 1, %s20
    %s61 = smul.u32 %s21, %s60
    %s62 = ssub.s32 1, %s34
    %s63 = smul.u32 %s30, %s62
    %s64 = ssub.s32 %s19, %s38
    %s65 = ssub.s32 %s61, %s63
    %s66 = sor.u32 %s64, %s65
    %p67 = scmp.eq.s32.totalorder %s66, 0
    %s69 = sadd.s32 %s68, 1
    %s70 = scalar_select %p67, %s68, %s69
    %p73 = pneg %p67
    %p74 = scmp.eq.s32.totalorder %s12, 3
    %p75 = por %p73, %p74
    %p76 = scmp.ne.s32.totalorder %s68, %s71
    %p77 = scmp.eq.s32.totalorder %s12, 0
    %p78 = por %p76, %p77
    %p79 = scmp.ne.s32.totalorder %s68, %s71
    %p80 = scmp.eq.s32.totalorder %s17, 3
    %p81 = por %p79, %p80
    %p82 = scmp.ne.s32.totalorder %s71, %s72
    %p83 = scmp.eq.s32.totalorder %s17, 0
    %p84 = por %p82, %p83
    %p85 = scmp.ne.s32.totalorder %s71, %s72
    %p86 = scmp.eq.s32.totalorder %s18, 3
    %p87 = por %p85, %p86
    %p89 = scmp.ne.s32.totalorder %s72, %s88
    %p90 = scmp.eq.s32.totalorder %s18, 0
    %p91 = por %p89, %p90
    %s92 = ssub.s32 1, %s20
    %s93 = smul.u32 %s21, %s92
    %s94 = ssub.s32 1, %s34
    %s95 = smul.u32 %s30, %s94
    %s96 = ssub.s32 %s19, %s38
    %s97 = ssub.s32 %s93, %s95
    %s98 = sor.u32 %s96, %s97
    %p99 = scmp.eq.s32.totalorder %s98, 0
    %s101 = sadd.s32 %s100, 1
    %s102 = scalar_select %p99, %s100, %s101
    %p105 = pneg %p99
    %p106 = scmp.eq.s32.totalorder %s12, 3
    %p107 = por %p105, %p106
    %p108 = scmp.ne.s32.totalorder %s100, %s103
    %p109 = scmp.eq.s32.totalorder %s12, 0
    %p110 = por %p108, %p109
    %p111 = scmp.ne.s32.totalorder %s100, %s103
    %p112 = scmp.eq.s32.totalorder %s17, 3
    %p113 = por %p111, %p112
    %p114 = scmp.ne.s32.totalorder %s103, %s104
    %p115 = scmp.eq.s32.totalorder %s17, 0
    %p116 = por %p114, %p115
    %p117 = scmp.ne.s32.totalorder %s103, %s104
    %p118 = scmp.eq.s32.totalorder %s18, 3
    %p119 = por %p117, %p118
    %p121 = scmp.ne.s32.totalorder %s104, %s120
    %p122 = scmp.eq.s32.totalorder %s18, 0
    %p123 = por %p121, %p122
    %s124 = smul.u32 %s21, %s20
    %s125 = smul.u32 %s30, %s34
    %s126 = ssub.s32 %s19, %s38
    %s127 = ssub.s32 %s124, %s125
    %s128 = sor.u32 %s126, %s127
    %p129 = scmp.eq.s32.totalorder %s128, 0
    %s131 = sadd.s32 %s130, 1
    %s132 = scalar_select %p129, %s130, %s131
    %p135 = pneg %p129
    %p136 = scmp.eq.s32.totalorder %s12, 3
    %p137 = por %p135, %p136
    %p138 = scmp.ne.s32.totalorder %s130, %s133
    %p139 = scmp.eq.s32.totalorder %s12, 0
    %p140 = por %p138, %p139
    %p141 = scmp.ne.s32.totalorder %s130, %s133
    %p142 = scmp.eq.s32.totalorder %s17, 3
    %p143 = por %p141, %p142
    %p144 = scmp.ne.s32.totalorder %s133, %s134
    %p145 = scmp.eq.s32.totalorder %s17, 0
    %p146 = por %p144, %p145
    %p147 = scmp.ne.s32.totalorder %s133, %s134
    %p148 = scmp.eq.s32.totalorder %s18, 3
    %p149 = por %p147, %p148
    %p151 = scmp.ne.s32.totalorder %s134, %s150
    %p152 = scmp.eq.s32.totalorder %s18, 0
    %p153 = por %p151, %p152
    %s154 = smul.u32 %s21, %s20
    %s155 = smul.u32 %s30, %s34
    %s156 = ssub.s32 %s19, %s38
    %s157 = ssub.s32 %s154, %s155
    %s158 = sor.u32 %s156, %s157
    %p159 = scmp.eq.s32.totalorder %s158, 0
    %s161 = sadd.s32 %s160, 1
    %s162 = scalar_select %p159, %s160, %s161
    %p165 = pneg %p159
    %p166 = scmp.eq.s32.totalorder %s12, 3
    %p167 = por %p165, %p166
    %p168 = scmp.ne.s32.totalorder %s160, %s163
    %p169 = scmp.eq.s32.totalorder %s12, 0
    %p170 = por %p168, %p169
    %p171 = scmp.ne.s32.totalorder %s160, %s163
    %p172 = scmp.eq.s32.totalorder %s17, 3
    %p173 = por %p171, %p172
    %p174 = scmp.ne.s32.totalorder %s163, %s164
    %p175 = scmp.eq.s32.totalorder %s17, 0
    %p176 = por %p174, %p175
    %p177 = scmp.ne.s32.totalorder %s163, %s164
    %p178 = scmp.eq.s32.totalorder %s18, 3
    %p179 = por %p177, %p178
    %p181 = scmp.ne.s32.totalorder %s164, %s180
    %p182 = scmp.eq.s32.totalorder %s18, 0
    %p183 = por %p181, %p182
    %s184 = smul.u32 %s21, %s20
    %s185 = smul.u32 %s30, %s34
    %s186 = ssub.s32 %s19, %s38
    %s187 = ssub.s32 %s184, %s185
    %s188 = sor.u32 %s186, %s187
    %p189 = scmp.eq.s32.totalorder %s188, 0
    %s191 = sadd.s32 %s190, 1
    %s192 = scalar_select %p189, %s190, %s191
    %p195 = pneg %p189
    %p196 = scmp.eq.s32.totalorder %s12, 3
    %p197 = por %p195, %p196
    %p198 = scmp.ne.s32.totalorder %s190, %s193
    %p199 = scmp.eq.s32.totalorder %s12, 0
    %p200 = por %p198, %p199
    %p201 = scmp.ne.s32.totalorder %s190, %s193
    %p202 = scmp.eq.s32.totalorder %s17, 3
    %p203 = por %p201, %p202
    %p204 = scmp.ne.s32.totalorder %s193, %s194
    %p205 = scmp.eq.s32.totalorder %s17, 0
    %p206 = por %p204, %p205
    %p207 = scmp.ne.s32.totalorder %s193, %s194
    %p208 = scmp.eq.s32.totalorder %s18, 3
    %p209 = por %p207, %p208
    %p211 = scmp.ne.s32.totalorder %s194, %s210
    %p212 = scmp.eq.s32.totalorder %s18, 0
    %p213 = por %p211, %p212
    %p214 = scmp.le.s32.totalorder 1, %s12
    %p215 = scmp.lt.s32.totalorder %s12, 5
    %p216 = pnand %p214, %p215
    %p217 = pneg %p216
    // Predicated region
    $region9: #{self_attention_forward.3} parent=5 // pred_check
      _
    $region10: #{self_attention_forward.3} parent=5 // pred_check_branch
      %219 = sbr.rel (%p216) target = $region12
    $region11: #{self_attention_forward.3} parent=5 // pred_region
      %s220 = ssub.s32 %s12, 1
      // Predicated region
      $region13: #{self_attention_forward.3} parent=11 // pred_check
        %p221 = pneg %p52
      $region14: #{self_attention_forward.3} parent=11 // pred_check_branch
        %223 = sbr.rel (%p221) target = $region16
      $region15: #{self_attention_forward.3} parent=11 // pred_region
        _
      $region16: #{self_attention_forward.3} parent=11 // pred_fallthru
        _
    $region12: #{self_attention_forward.3} parent=5 // pred_fallthru
      _
    %p224 = scmp.lt.s32.totalorder %s12, 4
    // Predicated region
    $region17: #{self_attention_forward.3} parent=5 // pred_check
      %p225 = pneg %p224
    $region18: #{self_attention_forward.3} parent=5 // pred_check_branch
      %227 = sbr.rel (%p225) target = $region20
    $region19: #{self_attention_forward.3} parent=5 // pred_region
      // Predicated region
      $region21: #{self_attention_forward.3} parent=19 // pred_check
        %p228 = pneg %p78
      $region22: #{self_attention_forward.3} parent=19 // pred_check_branch
        %230 = sbr.rel (%p228) target = $region24
      $region23: #{self_attention_forward.3} parent=19 // pred_region
        %s231 = ssub.s32 1, %s20
        %s232 = smul.u32 %s21, %s231
        %s233 = smul.u32 2, %s232
        %p234 = scmp.lt.s32.totalorder %s19, 1
        %s235 = scalar_select %p234, %s19, 1
        %p236 = scmp.lt.s32.totalorder %s233, 1
        %s237 = scalar_select %p236, %s233, 1
        %s238 = smul.addr %s235, 4
        %s239 = sadd.s32 %s237, %s238
        %s240 = smul.addr %s239, 4
        %s241 = scalar_lea.vmem %s1, %s240
        %s242 = ssub.s32 1, %s20
        %s243 = smul.u32 %s21, %s242
        %s244 = smul.u32 2, %s243
      $region24: #{self_attention_forward.3} parent=19 // pred_fallthru
        _
      // Predicated region
      $region25: #{self_attention_forward.3} parent=19 // pred_check
        %p245 = pneg %p110
      $region26: #{self_attention_forward.3} parent=19 // pred_check_branch
        %247 = sbr.rel (%p245) target = $region28
      $region27: #{self_attention_forward.3} parent=19 // pred_region
        %s248 = ssub.s32 1, %s20
        %s249 = smul.u32 %s21, %s248
        %s250 = smul.u32 32, %s249
        %p251 = scmp.lt.s32.totalorder %s19, 1
        %s252 = scalar_select %p251, %s19, 1
        %p253 = scmp.lt.s32.totalorder %s250, 31
        %s254 = scalar_select %p253, %s250, 31
        %s255 = smul.addr %s252, 32
        %s256 = sadd.s32 %s254, %s255
        %s257 = smul.addr %s256, 4
        %s258 = scalar_lea.vmem %s2, %s257
        %s259 = ssub.s32 1, %s20
        %s260 = smul.u32 %s21, %s259
        %s261 = smul.u32 32, %s260
      $region28: #{self_attention_forward.3} parent=19 // pred_fallthru
        _
      // Predicated region
      $region29: #{self_attention_forward.3} parent=19 // pred_check
        %p262 = pneg %p140
      $region30: #{self_attention_forward.3} parent=19 // pred_check_branch
        %264 = sbr.rel (%p262) target = $region32
      $region31: #{self_attention_forward.3} parent=19 // pred_region
        %s265 = smul.u32 %s21, %s20
        %s266 = smul.u32 32, %s265
        %p267 = scmp.lt.s32.totalorder %s19, 1
        %s268 = scalar_select %p267, %s19, 1
        %p269 = scmp.lt.s32.totalorder %s266, 31
        %s270 = scalar_select %p269, %s266, 31
        %s271 = smul.addr %s268, 32
        %s272 = sadd.s32 %s270, %s271
        %s273 = smul.addr %s272, 4
        %s274 = scalar_lea.vmem %s3, %s273
        %s275 = smul.u32 %s21, %s20
        %s276 = smul.u32 32, %s275
      $region32: #{self_attention_forward.3} parent=19 // pred_fallthru
        _
      // Predicated region
      $region33: #{self_attention_forward.3} parent=19 // pred_check
        %p277 = pneg %p170
      $region34: #{self_attention_forward.3} parent=19 // pred_check_branch
        %279 = sbr.rel (%p277) target = $region36
      $region35: #{self_attention_forward.3} parent=19 // pred_region
        %s280 = smul.u32 %s21, %s20
        %s281 = smul.u32 32, %s280
        %p282 = scmp.lt.s32.totalorder %s19, 1
        %s283 = scalar_select %p282, %s19, 1
        %p284 = scmp.lt.s32.totalorder %s281, 31
        %s285 = scalar_select %p284, %s281, 31
        %s286 = smul.addr %s283, 32
        %s287 = sadd.s32 %s285, %s286
        %s288 = smul.addr %s287, 8
        %s289 = scalar_lea.vmem %s4, %s288
        %s290 = smul.u32 %s21, %s20
        %s291 = smul.u32 32, %s290
      $region36: #{self_attention_forward.3} parent=19 // pred_fallthru
        _
    $region20: #{self_attention_forward.3} parent=5 // pred_fallthru
      _
    %p292 = scmp.le.s32.totalorder 1, %s12
    %p293 = scmp.lt.s32.totalorder %s12, 5
    %p294 = pnand %p292, %p293
    %p295 = pneg %p294
    // Predicated region
    $region37: #{self_attention_forward.3} parent=5 // pred_check
      _
    $region38: #{self_attention_forward.3} parent=5 // pred_check_branch
      %297 = sbr.rel (%p294) target = $region40
    $region39: #{self_attention_forward.3} parent=5 // pred_region
      %s298 = ssub.s32 %s12, 1
      %p299 = pneg %p52
      %p300 = pneg %p49
      %s301 = ssub.s32 1, %s23
      %s302 = smul.u32 %s24, %s301
      %s303 = smul.u32 2, %s302
      %p304 = scmp.lt.s32.totalorder %s22, 1
      %s305 = scalar_select %p304, %s22, 1
      %p306 = scmp.lt.s32.totalorder %s303, 1
      %s307 = scalar_select %p306, %s303, 1
      %s308 = smul.addr %s305, 4
      %s309 = sadd.s32 %s307, %s308
      %s310 = smul.addr %s309, 4
      %s311 = scalar_lea.vmem %s1, %s310
      %p312 = pneg %p84
      %p313 = pneg %p81
      %s314 = ssub.s32 1, %s23
      %s315 = smul.u32 %s24, %s314
      %s316 = smul.u32 32, %s315
      %p317 = scmp.lt.s32.totalorder %s22, 1
      %s318 = scalar_select %p317, %s22, 1
      %p319 = scmp.lt.s32.totalorder %s316, 31
      %s320 = scalar_select %p319, %s316, 31
      %s321 = smul.addr %s318, 32
      %s322 = sadd.s32 %s320, %s321
      %s323 = smul.addr %s322, 4
      %s324 = scalar_lea.vmem %s2, %s323
      %p325 = pneg %p116
      %p326 = pneg %p113
      %s327 = smul.u32 %s24, %s23
      %s328 = smul.u32 32, %s327
      %p329 = scmp.lt.s32.totalorder %s22, 1
      %s330 = scalar_select %p329, %s22, 1
      %p331 = scmp.lt.s32.totalorder %s328, 31
      %s332 = scalar_select %p331, %s328, 31
      %s333 = smul.addr %s330, 32
      %s334 = sadd.s32 %s332, %s333
      %s335 = smul.addr %s334, 4
      %s336 = scalar_lea.vmem %s3, %s335
      %p337 = pneg %p146
      %p338 = pneg %p143
      %s339 = smul.u32 %s24, %s23
      %s340 = smul.u32 32, %s339
      %p341 = scmp.lt.s32.totalorder %s22, 1
      %s342 = scalar_select %p341, %s22, 1
      %p343 = scmp.lt.s32.totalorder %s340, 31
      %s344 = scalar_select %p343, %s340, 31
      %s345 = smul.addr %s342, 32
      %s346 = sadd.s32 %s344, %s345
      %s347 = smul.addr %s346, 8
      %s348 = scalar_lea.vmem %s4, %s347
      %p349 = pneg %p176
      %p350 = pneg %p173
      %p351 = pneg %p206
      %p352 = pneg %p203
      %s353 = smul.u32 %s24, %s23
      %s354 = smul.u32 32, %s353
      %p355 = scmp.lt.s32.totalorder %s22, 1
      %s356 = scalar_select %p355, %s22, 1
      %p357 = scmp.lt.s32.totalorder %s354, 31
      %s358 = scalar_select %p357, %s354, 31
      %s359 = smul.addr %s356, 32
      %s360 = sadd.s32 %s358, %s359
      %s361 = smul.addr %s360, 8
      %s362 = scalar_lea.vmem %s5, %s361
      %s363 = ssub.s32 1, %s23
      %s364 = smul.u32 %s24, %s363
      %s365 = smul.u32 2, %s364
      %p366 = scmp.lt.s32.totalorder %s22, 1
      %s367 = scalar_select %p366, %s22, 1
      %p368 = scmp.lt.s32.totalorder %s365, 1
      %s369 = scalar_select %p368, %s365, 1
      %s370 = smul.addr %s367, 4
      %s371 = sadd.s32 %s369, %s370
      %s372 = smul.addr %s371, 4
      %s373 = scalar_lea.vmem %s1, %s372
      %s374 = ssub.s32 1, %s23
      %s375 = smul.u32 %s24, %s374
      %s376 = smul.u32 2, %s375
      %s377 = ssub.s32 1, %s23
      %s378 = smul.u32 %s24, %s377
      %s379 = smul.u32 32, %s378
      %p380 = scmp.lt.s32.totalorder %s22, 1
      %s381 = scalar_select %p380, %s22, 1
      %p382 = scmp.lt.s32.totalorder %s379, 31
      %s383 = scalar_select %p382, %s379, 31
      %s384 = smul.addr %s381, 32
      %s385 = sadd.s32 %s383, %s384
      %s386 = smul.addr %s385, 4
      %s387 = scalar_lea.vmem %s2, %s386
      %s388 = ssub.s32 1, %s23
      %s389 = smul.u32 %s24, %s388
      %s390 = smul.u32 32, %s389
      %s391 = smul.u32 %s24, %s23
      %s392 = smul.u32 32, %s391
      %p393 = scmp.lt.s32.totalorder %s22, 1
      %s394 = scalar_select %p393, %s22, 1
      %p395 = scmp.lt.s32.totalorder %s392, 31
      %s396 = scalar_select %p395, %s392, 31
      %s397 = smul.addr %s394, 32
      %s398 = sadd.s32 %s396, %s397
      %s399 = smul.addr %s398, 4
      %s400 = scalar_lea.vmem %s3, %s399
      %s401 = smul.u32 %s24, %s23
      %s402 = smul.u32 32, %s401
      %s403 = smul.u32 %s24, %s23
      %s404 = smul.u32 32, %s403
      %p405 = scmp.lt.s32.totalorder %s22, 1
      %s406 = scalar_select %p405, %s22, 1
      %p407 = scmp.lt.s32.totalorder %s404, 31
      %s408 = scalar_select %p407, %s404, 31
      %s409 = smul.addr %s406, 32
      %s410 = sadd.s32 %s408, %s409
      %s411 = smul.addr %s410, 8
      %s412 = scalar_lea.vmem %s4, %s411
      %s413 = smul.u32 %s24, %s23
      %s414 = smul.u32 32, %s413
      %s415 = smul.u32 %s24, %s23
      %s416 = smul.u32 32, %s415
      %p417 = scmp.lt.s32.totalorder %s22, 1
      %s418 = scalar_select %p417, %s22, 1
      %p419 = scmp.lt.s32.totalorder %s416, 31
      %s420 = scalar_select %p419, %s416, 31
      %s421 = smul.addr %s418, 32
      %s422 = sadd.s32 %s420, %s421
      %s423 = smul.addr %s422, 8
      %s424 = scalar_lea.vmem %s5, %s423
      %s425 = smul.u32 %s24, %s23
      %s426 = smul.u32 32, %s425
      %p428 = scmp.eq.s32.totalorder %s23, 0
      %p429 = scmp.eq.s32.totalorder %s24, 0
      %p430 = pnand %p428, %p429
      %p431 = pneg %p430
      // Predicated region
      $region41: #{self_attention_forward.3} parent=39 // pred_check
        _
      $region42: #{self_attention_forward.3} parent=39 // pred_check_branch
        %433 = sbr.rel (%p430) target = $region44
      $region43: #{self_attention_forward.3} parent=39 // pred_region
        %434 = vst [vmem:[#allocation2] sm:$0xff] 0.0
        %435 = vst [vmem:[#allocation2 + $0x8] sm:$0xff] 0.0
      $region44: #{self_attention_forward.3} parent=39 // pred_fallthru
        _
      // Predicated region
      $region45: #{self_attention_forward.3} parent=39 // pred_check
        %p436 = pneg %p428
      $region46: #{self_attention_forward.3} parent=39 // pred_check_branch
        %438 = sbr.rel (%p436) target = $region48
      $region47: #{self_attention_forward.3} parent=39 // pred_region
        %v439 = vld [vmem:[#allocation2] sm:$0xff]
        %v440 = vld [vmem:[#allocation2 + $0x8] sm:$0xff]
        %v441 = vld [vmem:[%s373] sm:$0xff]
        %v442 = vld [vmem:[%s373 + $0x8] sm:$0xff]
        %v443 = vld [vmem:[%s387] sm:$0xf]
        %v444 = vld [vmem:[%s387 + $0x4] sm:$0xf]
        %v445 = vld [vmem:[%s387 + $0x8] sm:$0xf]
        %v446 = vld [vmem:[%s387 + $0xc] sm:$0xf]
        %v447 = vld [vmem:[%s387 + $0x10] sm:$0xf]
        %v448 = vld [vmem:[%s387 + $0x14] sm:$0xf]
        %v449 = vld [vmem:[%s387 + $0x18] sm:$0xf]
        %v450 = vld [vmem:[%s387 + $0x1c] sm:$0xf]
        %v451 = vld [vmem:[%s387 + $0x20] sm:$0xf]
        %v452 = vld [vmem:[%s387 + $0x24] sm:$0xf]
        %v453 = vld [vmem:[%s387 + $0x28] sm:$0xf]
        %v454 = vld [vmem:[%s387 + $0x2c] sm:$0xf]
        %v455 = vld [vmem:[%s387 + $0x30] sm:$0xf]
        %v456 = vld [vmem:[%s387 + $0x34] sm:$0xf]
        %v457 = vld [vmem:[%s387 + $0x38] sm:$0xf]
        %v458 = vld [vmem:[%s387 + $0x3c] sm:$0xf]
        %v459 = vld [vmem:[%s387 + $0x40] sm:$0xf]
        %v460 = vld [vmem:[%s387 + $0x44] sm:$0xf]
        %v461 = vld [vmem:[%s387 + $0x48] sm:$0xf]
        %v462 = vld [vmem:[%s387 + $0x4c] sm:$0xf]
        %v463 = vld [vmem:[%s387 + $0x50] sm:$0xf]
        %v464 = vld [vmem:[%s387 + $0x54] sm:$0xf]
        %v465 = vld [vmem:[%s387 + $0x58] sm:$0xf]
        %v466 = vld [vmem:[%s387 + $0x5c] sm:$0xf]
        %v467 = vld [vmem:[%s387 + $0x60] sm:$0xf]
        %v468 = vld [vmem:[%s387 + $0x64] sm:$0xf]
        %v469 = vld [vmem:[%s387 + $0x68] sm:$0xf]
        %v470 = vld [vmem:[%s387 + $0x6c] sm:$0xf]
        %v471 = vld [vmem:[%s387 + $0x70] sm:$0xf]
        %v472 = vld [vmem:[%s387 + $0x74] sm:$0xf]
        %v473 = vld [vmem:[%s387 + $0x78] sm:$0xf]
        %v474 = vld [vmem:[%s387 + $0x7c] sm:$0xf]
        %v477 = vunpack.c.l.b16 %v441
        %v478 = vunpack.c.h.b16 %v441
        %v479 = vunpack.c.l.b16 %v442
        %v480 = vunpack.c.h.b16 %v442
        %v481 = vpack.c.b16 %v479, %v477
        %v482 = vpack.c.b16 %v480, %v478
        %v517 = vunpack.c.l.b16 %v443
        %v518 = vunpack.c.l.b16 %v444
        %v519 = vunpack.c.l.b16 %v445
        %v520 = vunpack.c.l.b16 %v446
        %v521 = vunpack.c.l.b16 %v447
        %v522 = vunpack.c.l.b16 %v448
        %v523 = vunpack.c.l.b16 %v449
        %v524 = vunpack.c.l.b16 %v450
        %v525 = vunpack.c.l.b16 %v451
        %v526 = vunpack.c.l.b16 %v452
        %v527 = vunpack.c.l.b16 %v453
        %v528 = vunpack.c.l.b16 %v454
        %v529 = vunpack.c.l.b16 %v455
        %v530 = vunpack.c.l.b16 %v456
        %v531 = vunpack.c.l.b16 %v457
        %v532 = vunpack.c.l.b16 %v458
        %v533 = vunpack.c.l.b16 %v459
        %v534 = vunpack.c.l.b16 %v460
        %v535 = vunpack.c.l.b16 %v461
        %v536 = vunpack.c.l.b16 %v462
        %v537 = vunpack.c.l.b16 %v463
        %v538 = vunpack.c.l.b16 %v464
        %v539 = vunpack.c.l.b16 %v465
        %v540 = vunpack.c.l.b16 %v466
        %v541 = vunpack.c.l.b16 %v467
        %v542 = vunpack.c.l.b16 %v468
        %v543 = vunpack.c.l.b16 %v469
        %v544 = vunpack.c.l.b16 %v470
        %v545 = vunpack.c.l.b16 %v471
        %v546 = vunpack.c.l.b16 %v472
        %v547 = vunpack.c.l.b16 %v473
        %v548 = vunpack.c.l.b16 %v474
        %v549 = vpack.c.b16 %v518, %v517
        %v550 = vpack.c.b16 %v520, %v519
        %v551 = vpack.c.b16 %v522, %v521
        %v552 = vpack.c.b16 %v524, %v523
        %v553 = vpack.c.b16 %v526, %v525
        %v554 = vpack.c.b16 %v528, %v527
        %v555 = vpack.c.b16 %v530, %v529
        %v556 = vpack.c.b16 %v532, %v531
        %v557 = vpack.c.b16 %v534, %v533
        %v558 = vpack.c.b16 %v536, %v535
        %v559 = vpack.c.b16 %v538, %v537
        %v560 = vpack.c.b16 %v540, %v539
        %v561 = vpack.c.b16 %v542, %v541
        %v562 = vpack.c.b16 %v544, %v543
        %v563 = vpack.c.b16 %v546, %v545
        %v564 = vpack.c.b16 %v548, %v547
        %581 = vmatprep.subr.bf16.mxu0 0
        %582 = vmatpush1.bf16.msra.mxu0 %v549
        %583 = vmatprep.subr.bf16.mxu0 0
        %584 = vmatpush1.bf16.msra.mxu0 %v550
        %585 = vmatprep.subr.bf16.mxu0 0
        %586 = vmatpush1.bf16.msra.mxu0 %v551
        %587 = vmatprep.subr.bf16.mxu0 0
        %588 = vmatpush1.bf16.msra.mxu0 %v552
        %589 = vmatprep.subr.bf16.mxu0 0
        %590 = vmatpush1.bf16.msra.mxu0 %v553
        %591 = vmatprep.subr.bf16.mxu0 0
        %592 = vmatpush1.bf16.msra.mxu0 %v554
        %593 = vmatprep.subr.bf16.mxu0 0
        %594 = vmatpush1.bf16.msra.mxu0 %v555
        %595 = vmatprep.subr.bf16.mxu0 0
        %596 = vmatpush1.bf16.msra.mxu0 %v556
        %597 = vmatprep.subr.bf16.mxu0 0
        %598 = vmatpush1.bf16.msra.mxu0 %v557
        %599 = vmatprep.subr.bf16.mxu0 0
        %600 = vmatpush1.bf16.msra.mxu0 %v558
        %601 = vmatprep.subr.bf16.mxu0 0
        %602 = vmatpush1.bf16.msra.mxu0 %v559
        %603 = vmatprep.subr.bf16.mxu0 0
        %604 = vmatpush1.bf16.msra.mxu0 %v560
        %605 = vmatprep.subr.bf16.mxu0 0
        %606 = vmatpush1.bf16.msra.mxu0 %v561
        %607 = vmatprep.subr.bf16.mxu0 0
        %608 = vmatpush1.bf16.msra.mxu0 %v562
        %609 = vmatprep.subr.bf16.mxu0 0
        %610 = vmatpush1.bf16.msra.mxu0 %v563
        %611 = vmatprep.subr.bf16.mxu0 0
        %612 = vmatpush1.bf16.msra.mxu0 %v564
        %613 = vmatprep.mubr.bf16.mxu0 %v482
        %614 = vmatmul.mubr.bf16.gmra.mrb[0].mxu0 %v481
        %v615 = vpop.f32.mrb[0].mxu0
        %v616 = vadd.f32 0.0, %v615
        %v617 = vpop.f32.mrb[0].mxu0
        %v618 = vpop.f32.mrb[0].mxu0
        %v619 = vadd.f32 0.0, %v618
        %v620 = vpop.f32.mrb[0].mxu0
        %621 = vdwg.mxu0
        %v622 = vadd.f32 %v439, %v616
        %v623 = vadd.f32 %v440, %v619
        %624 = vst [vmem:[#allocation2] sm:$0xff] %v622
        %625 = vst [vmem:[#allocation2 + $0x8] sm:$0xff] %v623
      $region48: #{self_attention_forward.3} parent=39 // pred_fallthru
        _
      %p626 = scmp.eq.s32.totalorder %s23, 1
      // Predicated region
      $region49: #{self_attention_forward.3} parent=39 // pred_check
        %p627 = pneg %p626
      $region50: #{self_attention_forward.3} parent=39 // pred_check_branch
        %629 = sbr.rel (%p627) target = $region52
      $region51: #{self_attention_forward.3} parent=39 // pred_region
        %s630 = sld [smem:[#allocation3]]
        %v631 = vld [vmem:[#allocation2] sm:$0xff]
        %v632 = vld [vmem:[#allocation2 + $0x8] sm:$0xff]
        %v633 = vstv %s630
        %v634 = vmul.f32 %v633, %v631
        %v635 = vmul.f32 %v633, %v632
        %v636 = vpack.c.bf16 %v635, %v634
        %v637 = vld [vmem:[%s400] sm:$0xf]
        %v638 = vld [vmem:[%s400 + $0x4] sm:$0xf]
        %v639 = vld [vmem:[%s400 + $0x8] sm:$0xf]
        %v640 = vld [vmem:[%s400 + $0xc] sm:$0xf]
        %v641 = vld [vmem:[%s400 + $0x10] sm:$0xf]
        %v642 = vld [vmem:[%s400 + $0x14] sm:$0xf]
        %v643 = vld [vmem:[%s400 + $0x18] sm:$0xf]
        %v644 = vld [vmem:[%s400 + $0x1c] sm:$0xf]
        %v645 = vld [vmem:[%s400 + $0x20] sm:$0xf]
        %v646 = vld [vmem:[%s400 + $0x24] sm:$0xf]
        %v647 = vld [vmem:[%s400 + $0x28] sm:$0xf]
        %v648 = vld [vmem:[%s400 + $0x2c] sm:$0xf]
        %v649 = vld [vmem:[%s400 + $0x30] sm:$0xf]
        %v650 = vld [vmem:[%s400 + $0x34] sm:$0xf]
        %v651 = vld [vmem:[%s400 + $0x38] sm:$0xf]
        %v652 = vld [vmem:[%s400 + $0x3c] sm:$0xf]
        %v653 = vld [vmem:[%s400 + $0x40] sm:$0xf]
        %v654 = vld [vmem:[%s400 + $0x44] sm:$0xf]
        %v655 = vld [vmem:[%s400 + $0x48] sm:$0xf]
        %v656 = vld [vmem:[%s400 + $0x4c] sm:$0xf]
        %v657 = vld [vmem:[%s400 + $0x50] sm:$0xf]
        %v658 = vld [vmem:[%s400 + $0x54] sm:$0xf]
        %v659 = vld [vmem:[%s400 + $0x58] sm:$0xf]
        %v660 = vld [vmem:[%s400 + $0x5c] sm:$0xf]
        %v661 = vld [vmem:[%s400 + $0x60] sm:$0xf]
        %v662 = vld [vmem:[%s400 + $0x64] sm:$0xf]
        %v663 = vld [vmem:[%s400 + $0x68] sm:$0xf]
        %v664 = vld [vmem:[%s400 + $0x6c] sm:$0xf]
        %v665 = vld [vmem:[%s400 + $0x70] sm:$0xf]
        %v666 = vld [vmem:[%s400 + $0x74] sm:$0xf]
        %v667 = vld [vmem:[%s400 + $0x78] sm:$0xf]
        %v668 = vld [vmem:[%s400 + $0x7c] sm:$0xf]
        %v669 = vld [vmem:[%s412] sm:$0xff]
        %v670 = vld [vmem:[%s412 + $0x8] sm:$0xff]
        %v671 = vld [vmem:[%s412 + $0x10] sm:$0xff]
        %v672 = vld [vmem:[%s412 + $0x18] sm:$0xff]
        %v673 = vld [vmem:[%s412 + $0x20] sm:$0xff]
        %v674 = vld [vmem:[%s412 + $0x28] sm:$0xff]
        %v675 = vld [vmem:[%s412 + $0x30] sm:$0xff]
        %v676 = vld [vmem:[%s412 + $0x38] sm:$0xff]
        %v677 = vld [vmem:[%s412 + $0x40] sm:$0xff]
        %v678 = vld [vmem:[%s412 + $0x48] sm:$0xff]
        %v679 = vld [vmem:[%s412 + $0x50] sm:$0xff]
        %v680 = vld [vmem:[%s412 + $0x58] sm:$0xff]
        %v681 = vld [vmem:[%s412 + $0x60] sm:$0xff]
        %v682 = vld [vmem:[%s412 + $0x68] sm:$0xff]
        %v683 = vld [vmem:[%s412 + $0x70] sm:$0xff]
        %v684 = vld [vmem:[%s412 + $0x78] sm:$0xff]
        %v685 = vld [vmem:[%s412 + $0x80] sm:$0xff]
        %v686 = vld [vmem:[%s412 + $0x88] sm:$0xff]
        %v687 = vld [vmem:[%s412 + $0x90] sm:$0xff]
        %v688 = vld [vmem:[%s412 + $0x98] sm:$0xff]
        %v689 = vld [vmem:[%s412 + $0xa0] sm:$0xff]
        %v690 = vld [vmem:[%s412 + $0xa8] sm:$0xff]
        %v691 = vld [vmem:[%s412 + $0xb0] sm:$0xff]
        %v692 = vld [vmem:[%s412 + $0xb8] sm:$0xff]
        %v693 = vld [vmem:[%s412 + $0xc0] sm:$0xff]
        %v694 = vld [vmem:[%s412 + $0xc8] sm:$0xff]
        %v695 = vld [vmem:[%s412 + $0xd0] sm:$0xff]
        %v696 = vld [vmem:[%s412 + $0xd8] sm:$0xff]
        %v697 = vld [vmem:[%s412 + $0xe0] sm:$0xff]
        %v698 = vld [vmem:[%s412 + $0xe8] sm:$0xff]
        %v699 = vld [vmem:[%s412 + $0xf0] sm:$0xff]
        %v700 = vld [vmem:[%s412 + $0xf8] sm:$0xff]
        %v733 = vunpack.c.l.b16 %v637
        %v734 = vunpack.c.l.b16 %v638
        %v735 = vunpack.c.l.b16 %v639
        %v736 = vunpack.c.l.b16 %v640
        %v737 = vunpack.c.l.b16 %v641
        %v738 = vunpack.c.l.b16 %v642
        %v739 = vunpack.c.l.b16 %v643
        %v740 = vunpack.c.l.b16 %v644
        %v741 = vunpack.c.l.b16 %v645
        %v742 = vunpack.c.l.b16 %v646
        %v743 = vunpack.c.l.b16 %v647
        %v744 = vunpack.c.l.b16 %v648
        %v745 = vunpack.c.l.b16 %v649
        %v746 = vunpack.c.l.b16 %v650
        %v747 = vunpack.c.l.b16 %v651
        %v748 = vunpack.c.l.b16 %v652
        %v749 = vunpack.c.l.b16 %v653
        %v750 = vunpack.c.l.b16 %v654
        %v751 = vunpack.c.l.b16 %v655
        %v752 = vunpack.c.l.b16 %v656
        %v753 = vunpack.c.l.b16 %v657
        %v754 = vunpack.c.l.b16 %v658
        %v755 = vunpack.c.l.b16 %v659
        %v756 = vunpack.c.l.b16 %v660
        %v757 = vunpack.c.l.b16 %v661
        %v758 = vunpack.c.l.b16 %v662
        %v759 = vunpack.c.l.b16 %v663
        %v760 = vunpack.c.l.b16 %v664
        %v761 = vunpack.c.l.b16 %v665
        %v762 = vunpack.c.l.b16 %v666
        %v763 = vunpack.c.l.b16 %v667
        %v764 = vunpack.c.l.b16 %v668
        %v765 = vpack.c.b16 %v734, %v733
        %v766 = vpack.c.b16 %v736, %v735
        %v767 = vpack.c.b16 %v738, %v737
        %v768 = vpack.c.b16 %v740, %v739
        %v769 = vpack.c.b16 %v742, %v741
        %v770 = vpack.c.b16 %v744, %v743
        %v771 = vpack.c.b16 %v746, %v745
        %v772 = vpack.c.b16 %v748, %v747
        %v773 = vpack.c.b16 %v750, %v749
        %v774 = vpack.c.b16 %v752, %v751
        %v775 = vpack.c.b16 %v754, %v753
        %v776 = vpack.c.b16 %v756, %v755
        %v777 = vpack.c.b16 %v758, %v757
        %v778 = vpack.c.b16 %v760, %v759
        %v779 = vpack.c.b16 %v762, %v761
        %v780 = vpack.c.b16 %v764, %v763
        %vm781 = vcmask 130048
        %v783 = vsel %vm781, %v765, 0
        %v786 = vsel %vm781, %v766, 0
        %v789 = vsel %vm781, %v767, 0
        %v792 = vsel %vm781, %v768, 0
        %v795 = vsel %vm781, %v769, 0
        %v798 = vsel %vm781, %v770, 0
        %v801 = vsel %vm781, %v771, 0
        %v804 = vsel %vm781, %v772, 0
        %v807 = vsel %vm781, %v773, 0
        %v810 = vsel %vm781, %v774, 0
        %v813 = vsel %vm781, %v775, 0
        %v816 = vsel %vm781, %v776, 0
        %v819 = vsel %vm781, %v777, 0
        %v822 = vsel %vm781, %v778, 0
        %v825 = vsel %vm781, %v779, 0
        %v828 = vsel %vm781, %v780, 0
        %830 = vmatprep.subr.bf16.mxu0 0
        %831 = vmatpush1.bf16.msra.mxu0 %v636
        %832 = vmatprep.subr.bf16.mxu0 0
        %833 = vmatpush1.bf16.msra.mxu0 0
        %834 = vmatprep.subr.bf16.mxu0 0
        %835 = vmatpush1.bf16.msra.mxu0 0
        %836 = vmatprep.subr.bf16.mxu0 0
        %837 = vmatpush1.bf16.msra.mxu0 0
        %838 = vmatprep.subr.bf16.mxu0 0
        %839 = vmatpush1.bf16.msra.mxu0 0
        %840 = vmatprep.subr.bf16.mxu0 0
        %841 = vmatpush1.bf16.msra.mxu0 0
        %842 = vmatprep.subr.bf16.mxu0 0
        %843 = vmatpush1.bf16.msra.mxu0 0
        %844 = vmatprep.subr.bf16.mxu0 0
        %845 = vmatpush1.bf16.msra.mxu0 0
        %846 = vmatprep.subr.bf16.mxu0 0
        %847 = vmatpush1.bf16.msra.mxu0 0
        %848 = vmatprep.subr.bf16.mxu0 0
        %849 = vmatpush1.bf16.msra.mxu0 0
        %850 = vmatprep.subr.bf16.mxu0 0
        %851 = vmatpush1.bf16.msra.mxu0 0
        %852 = vmatprep.subr.bf16.mxu0 0
        %853 = vmatpush1.bf16.msra.mxu0 0
        %854 = vmatprep.subr.bf16.mxu0 0
        %855 = vmatpush1.bf16.msra.mxu0 0
        %856 = vmatprep.subr.bf16.mxu0 0
        %857 = vmatpush1.bf16.msra.mxu0 0
        %858 = vmatprep.subr.bf16.mxu0 0
        %859 = vmatpush1.bf16.msra.mxu0 0
        %860 = vmatprep.subr.bf16.mxu0 0
        %861 = vmatpush1.bf16.msra.mxu0 0
        %862 = vmatprep.mubr.bf16.mxu0 0
        %863 = vmatmul.mubr.bf16.gmra.mrb[0].mxu0 %v783
        %v864 = vpop.f32.mrb[0].mxu0
        %v865 = vadd.f32 %v669, %v864
        %v866 = vpop.f32.mrb[0].mxu0
        %v867 = vpop.f32.mrb[0].mxu0
        %v868 = vadd.f32 %v670, %v867
        %v869 = vpop.f32.mrb[0].mxu0
        %870 = vmatprep.mubr.bf16.mxu0 0
        %871 = vmatmul.mubr.bf16.gmra.mrb[0].mxu0 %v786
        %v872 = vpop.f32.mrb[0].mxu0
        %v873 = vadd.f32 %v671, %v872
        %v874 = vpop.f32.mrb[0].mxu0
        %v875 = vpop.f32.mrb[0].mxu0
        %v876 = vadd.f32 %v672, %v875
        %v877 = vpop.f32.mrb[0].mxu0
        %878 = vmatprep.mubr.bf16.mxu0 0
        %879 = vmatmul.mubr.bf16.gmra.mrb[0].mxu0 %v789
        %v880 = vpop.f32.mrb[0].mxu0
        %v881 = vadd.f32 %v673, %v880
        %v882 = vpop.f32.mrb[0].mxu0
        %v883 = vpop.f32.mrb[0].mxu0
        %v884 = vadd.f32 %v674, %v883
        %v885 = vpop.f32.mrb[0].mxu0
        %886 = vmatprep.mubr.bf16.mxu0 0
        %887 = vmatmul.mubr.bf16.gmra.mrb[0].mxu0 %v792
        %v888 = vpop.f32.mrb[0].mxu0
        %v889 = vadd.f32 %v675, %v888
        %v890 = vpop.f32.mrb[0].mxu0
        %v891 = vpop.f32.mrb[0].mxu0
        %v892 = vadd.f32 %v676, %v891
        %v893 = vpop.f32.mrb[0].mxu0
        %894 = vmatprep.mubr.bf16.mxu0 0
        %895 = vmatmul.mubr.bf16.gmra.mrb[0].mxu0 %v795
        %v896 = vpop.f32.mrb[0].mxu0
        %v897 = vadd.f32 %v677, %v896
        %v898 = vpop.f32.mrb[0].mxu0
        %v899 = vpop.f32.mrb[0].mxu0
        %v900 = vadd.f32 %v678, %v899
        %v901 = vpop.f32.mrb[0].mxu0
        %902 = vmatprep.mubr.bf16.mxu0 0
        %903 = vmatmul.mubr.bf16.gmra.mrb[0].mxu0 %v798
        %v904 = vpop.f32.mrb[0].mxu0
        %v905 = vadd.f32 %v679, %v904
        %v906 = vpop.f32.mrb[0].mxu0
        %v907 = vpop.f32.mrb[0].mxu0
        %v908 = vadd.f32 %v680, %v907
        %v909 = vpop.f32.mrb[0].mxu0
        %910 = vmatprep.mubr.bf16.mxu0 0
        %911 = vmatmul.mubr.bf16.gmra.mrb[0].mxu0 %v801
        %v912 = vpop.f32.mrb[0].mxu0
        %v913 = vadd.f32 %v681, %v912
        %v914 = vpop.f32.mrb[0].mxu0
        %v915 = vpop.f32.mrb[0].mxu0
        %v916 = vadd.f32 %v682, %v915
        %v917 = vpop.f32.mrb[0].mxu0
        %918 = vmatprep.mubr.bf16.mxu0 0
        %919 = vmatmul.mubr.bf16.gmra.mrb[0].mxu0 %v804
        %v920 = vpop.f32.mrb[0].mxu0
        %v921 = vadd.f32 %v683, %v920
        %v922 = vpop.f32.mrb[0].mxu0
        %v923 = vpop.f32.mrb[0].mxu0
        %v924 = vadd.f32 %v684, %v923
        %v925 = vpop.f32.mrb[0].mxu0
        %926 = vmatprep.mubr.bf16.mxu0 0
        %927 = vmatmul.mubr.bf16.gmra.mrb[0].mxu0 %v807
        %v928 = vpop.f32.mrb[0].mxu0
        %v929 = vadd.f32 %v685, %v928
        %v930 = vpop.f32.mrb[0].mxu0
        %v931 = vpop.f32.mrb[0].mxu0
        %v932 = vadd.f32 %v686, %v931
        %v933 = vpop.f32.mrb[0].mxu0
        %934 = vmatprep.mubr.bf16.mxu0 0
        %935 = vmatmul.mubr.bf16.gmra.mrb[0].mxu0 %v810
        %v936 = vpop.f32.mrb[0].mxu0
        %v937 = vadd.f32 %v687, %v936
        %v938 = vpop.f32.mrb[0].mxu0
        %v939 = vpop.f32.mrb[0].mxu0
        %v940 = vadd.f32 %v688, %v939
        %v941 = vpop.f32.mrb[0].mxu0
        %942 = vmatprep.mubr.bf16.mxu0 0
        %943 = vmatmul.mubr.bf16.gmra.mrb[0].mxu0 %v813
        %v944 = vpop.f32.mrb[0].mxu0
        %v945 = vadd.f32 %v689, %v944
        %v946 = vpop.f32.mrb[0].mxu0
        %v947 = vpop.f32.mrb[0].mxu0
        %v948 = vadd.f32 %v690, %v947
        %v949 = vpop.f32.mrb[0].mxu0
        %950 = vmatprep.mubr.bf16.mxu0 0
        %951 = vmatmul.mubr.bf16.gmra.mrb[0].mxu0 %v816
        %v952 = vpop.f32.mrb[0].mxu0
        %v953 = vadd.f32 %v691, %v952
        %v954 = vpop.f32.mrb[0].mxu0
        %v955 = vpop.f32.mrb[0].mxu0
        %v956 = vadd.f32 %v692, %v955
        %v957 = vpop.f32.mrb[0].mxu0
        %958 = vmatprep.mubr.bf16.mxu0 0
        %959 = vmatmul.mubr.bf16.gmra.mrb[0].mxu0 %v819
        %v960 = vpop.f32.mrb[0].mxu0
        %v961 = vadd.f32 %v693, %v960
        %v962 = vpop.f32.mrb[0].mxu0
        %v963 = vpop.f32.mrb[0].mxu0
        %v964 = vadd.f32 %v694, %v963
        %v965 = vpop.f32.mrb[0].mxu0
        %966 = vmatprep.mubr.bf16.mxu0 0
        %967 = vmatmul.mubr.bf16.gmra.mrb[0].mxu0 %v822
        %v968 = vpop.f32.mrb[0].mxu0
        %v969 = vadd.f32 %v695, %v968
        %v970 = vpop.f32.mrb[0].mxu0
        %v971 = vpop.f32.mrb[0].mxu0
        %v972 = vadd.f32 %v696, %v971
        %v973 = vpop.f32.mrb[0].mxu0
        %974 = vmatprep.mubr.bf16.mxu0 0
        %975 = vmatmul.mubr.bf16.gmra.mrb[0].mxu0 %v825
        %v976 = vpop.f32.mrb[0].mxu0
        %v977 = vadd.f32 %v697, %v976
        %v978 = vpop.f32.mrb[0].mxu0
        %v979 = vpop.f32.mrb[0].mxu0
        %v980 = vadd.f32 %v698, %v979
        %v981 = vpop.f32.mrb[0].mxu0
        %982 = vmatprep.mubr.bf16.mxu0 0
        %983 = vmatmul.mubr.bf16.gmra.mrb[0].mxu0 %v828
        %v984 = vpop.f32.mrb[0].mxu0
        %v985 = vadd.f32 %v699, %v984
        %v986 = vpop.f32.mrb[0].mxu0
        %v987 = vpop.f32.mrb[0].mxu0
        %v988 = vadd.f32 %v700, %v987
        %v989 = vpop.f32.mrb[0].mxu0
        %990 = vdwg.mxu0
        %991 = vst [vmem:[%s424] sm:$0xff] %v865
        %992 = vst [vmem:[%s424 + $0x8] sm:$0xff] %v868
        %993 = vst [vmem:[%s424 + $0x10] sm:$0xff] %v873
        %994 = vst [vmem:[%s424 + $0x18] sm:$0xff] %v876
        %995 = vst [vmem:[%s424 + $0x20] sm:$0xff] %v881
        %996 = vst [vmem:[%s424 + $0x28] sm:$0xff] %v884
        %997 = vst [vmem:[%s424 + $0x30] sm:$0xff] %v889
        %998 = vst [vmem:[%s424 + $0x38] sm:$0xff] %v892
        %999 = vst [vmem:[%s424 + $0x40] sm:$0xff] %v897
        %1000 = vst [vmem:[%s424 + $0x48] sm:$0xff] %v900
        %1001 = vst [vmem:[%s424 + $0x50] sm:$0xff] %v905
        %1002 = vst [vmem:[%s424 + $0x58] sm:$0xff] %v908
        %1003 = vst [vmem:[%s424 + $0x60] sm:$0xff] %v913
        %1004 = vst [vmem:[%s424 + $0x68] sm:$0xff] %v916
        %1005 = vst [vmem:[%s424 + $0x70] sm:$0xff] %v921
        %1006 = vst [vmem:[%s424 + $0x78] sm:$0xff] %v924
        %1007 = vst [vmem:[%s424 + $0x80] sm:$0xff] %v929
        %1008 = vst [vmem:[%s424 + $0x88] sm:$0xff] %v932
        %1009 = vst [vmem:[%s424 + $0x90] sm:$0xff] %v937
        %1010 = vst [vmem:[%s424 + $0x98] sm:$0xff] %v940
        %1011 = vst [vmem:[%s424 + $0xa0] sm:$0xff] %v945
        %1012 = vst [vmem:[%s424 + $0xa8] sm:$0xff] %v948
        %1013 = vst [vmem:[%s424 + $0xb0] sm:$0xff] %v953
        %1014 = vst [vmem:[%s424 + $0xb8] sm:$0xff] %v956
        %1015 = vst [vmem:[%s424 + $0xc0] sm:$0xff] %v961
        %1016 = vst [vmem:[%s424 + $0xc8] sm:$0xff] %v964
        %1017 = vst [vmem:[%s424 + $0xd0] sm:$0xff] %v969
        %1018 = vst [vmem:[%s424 + $0xd8] sm:$0xff] %v972
        %1019 = vst [vmem:[%s424 + $0xe0] sm:$0xff] %v977
        %1020 = vst [vmem:[%s424 + $0xe8] sm:$0xff] %v980
        %1021 = vst [vmem:[%s424 + $0xf0] sm:$0xff] %v985
        %1022 = vst [vmem:[%s424 + $0xf8] sm:$0xff] %v988
      $region52: #{self_attention_forward.3} parent=39 // pred_fallthru
        _
      %s1023 = smul.u32 %s24, %s23
      %s1024 = smul.u32 32, %s1023
      %p1025 = scmp.lt.s32.totalorder %s22, 1
      %s1026 = scalar_select %p1025, %s22, 1
      %p1027 = scmp.lt.s32.totalorder %s1024, 31
      %s1028 = scalar_select %p1027, %s1024, 31
      %s1029 = smul.addr %s1026, 32
      %s1030 = sadd.s32 %s1028, %s1029
      %s1031 = smul.addr %s1030, 8
      %s1032 = scalar_lea.vmem %s5, %s1031
      // Predicated region
      $region53: #{self_attention_forward.3} parent=39 // pred_check
        %p1033 = pneg %p203
      $region54: #{self_attention_forward.3} parent=39 // pred_check_branch
        %1035 = sbr.rel (%p1033) target = $region56
      $region55: #{self_attention_forward.3} parent=39 // pred_region
        %s1036 = smul.u32 %s24, %s23
        %s1037 = smul.u32 32, %s1036
      $region56: #{self_attention_forward.3} parent=39 // pred_fallthru
        _
    $region40: #{self_attention_forward.3} parent=5 // pred_fallthru
      _
    %p1038 = scmp.le.s32.totalorder 2, %s12
    // Predicated region
    $region57: #{self_attention_forward.3} parent=5 // pred_check
      %p1039 = pneg %p1038
    $region58: #{self_attention_forward.3} parent=5 // pred_check_branch
      %1041 = sbr.rel (%p1039) target = $region60
    $region59: #{self_attention_forward.3} parent=5 // pred_region
      %s1042 = ssub.s32 %s12, 2
      // Predicated region
      $region61: #{self_attention_forward.3} parent=59 // pred_check
        %p1043 = pneg %p209
      $region62: #{self_attention_forward.3} parent=59 // pred_check_branch
        %1045 = sbr.rel (%p1043) target = $region64
      $region63: #{self_attention_forward.3} parent=59 // pred_region
        %s1046 = smul.u32 %s27, %s26
        %s1047 = smul.u32 32, %s1046
        %p1048 = scmp.lt.s32.totalorder %s25, 1
        %s1049 = scalar_select %p1048, %s25, 1
        %p1050 = scmp.lt.s32.totalorder %s1047, 31
        %s1051 = scalar_select %p1050, %s1047, 31
        %s1052 = smul.addr %s1049, 32
        %s1053 = sadd.s32 %s1051, %s1052
        %s1054 = smul.addr %s1053, 8
        %s1055 = scalar_lea.vmem %s5, %s1054
      $region64: #{self_attention_forward.3} parent=59 // pred_fallthru
        _
    $region60: #{self_attention_forward.3} parent=5 // pred_fallthru
      _
  $region6: #{self_attention_forward.3} parent=0 // loop_footer
    %s16 = sadd.s32 1, %s12
  $region7: #{self_attention_forward.3} parent=0 // loop_footer_branch
    %11 = sbr.rel target = $region3
  $region8: #{self_attention_forward.3} parent=0 // loop_exit
    _

</llo_original>
